<compile_context>
chip_gen: v6e
topology: v6e:2x2x1
jax: 0.10.0
libtpu: 0.0.40
codegen_flags: <defaults>
</compile_context>

<pallas_src>
import jax
import jax.numpy as jnp
from jax.experimental import pallas as pl
from jax.experimental.pallas import tpu as pltpu


def _cdiv(a, b):
    return (a + b - 1) // b


def _round_up(v, m):
    return _cdiv(v, m) * m


def _vmem_capacity_bytes():
    try:
        return int(pltpu.get_tpu_info().vmem_capacity_bytes)
    except Exception:
        pass
    try:
        kind = jax.devices()[0].device_kind.lower()
        if any(t in kind for t in ("v4", "v5", "v6")):
            return 128 << 20
    except Exception:
        pass
    return 64 << 20          # conservative default: v7x has 64 MiB per TC


def _num_tensorcores():
    try:
        if "v7" in jax.devices()[0].device_kind.lower():
            return 2
    except Exception:
        pass
    return 1


def _make_kernel(apply_w: bool, tb: int, precision):
    """Per-grid-step body.

    apply_w: channel mix (W @ .) done in-kernel (x_first order); otherwise the
             resident slab is already W @ x and we do a single dot per batch.
    tb:      static number of batch elements packed into one grid step.
    """

    def body(y_ref, adj_ref, w, b_ref, o_ref):
        c_out, tn = o_ref.shape[1], o_ref.shape[2]
        # Hoisted once per grid step (JAX does not CSE broadcast_in_dim).
        bias = jnp.broadcast_to(b_ref[...], (c_out, tn))
        for i in range(tb):                            # static unroll, tb <= 8
            acc = jnp.dot(y_ref[i], adj_ref[i],        # (C, N) @ (N, TN)
                          preferred_element_type=jnp.float32,
                          precision=precision)
            if apply_w:
                acc = jnp.dot(w, acc,                  # (C_out, C) @ (C, TN)
                              preferred_element_type=jnp.float32,
                              precision=precision)
            o_ref[i] = (acc + bias).astype(o_ref.dtype)

    if apply_w:
        def kernel(y_ref, adj_ref, w_ref, b_ref, o_ref):
            body(y_ref, adj_ref, w_ref[...], b_ref, o_ref)
    else:
        def kernel(y_ref, adj_ref, b_ref, o_ref):
            body(y_ref, adj_ref, None, b_ref, o_ref)
    return kernel


def graph_convolution(adj, x, weight, bias=None, *, compute_dtype=None,
                      tn_max=None):
    """Forward of GraphConvolution.

    adj:    (B, N, N)
    x:      (B, C_in, N)          PyTorch Conv1d NCL layout
    weight: (C_out, C_in) or (C_out, C_in, 1)  Conv1d weight
    bias:   (C_out,) or None
    compute_dtype: optional streaming dtype for x/adj/weight (e.g.
        jnp.bfloat16 roughly halves the HBM-bound adj traffic); accumulation
        stays f32 and the output keeps x's original dtype.
    Returns (B, C_out, N).
    """
    if weight.ndim == 3:              # accept raw Conv1d weight (C_out, C_in, 1)
        weight = weight[..., 0]
    B, C_in, N = x.shape
    assert adj.shape == (B, N, N), "adj must be (B, N, N)"
    C_out = weight.shape[0]
    out_dtype = x.dtype
    out_sz = out_dtype.itemsize

    # One streaming dtype for all matmul operands (reconcile mixed inputs).
    if compute_dtype is not None:
        stream_dtype = jnp.result_type(compute_dtype)
    else:
        stream_dtype = jnp.result_type(x.dtype, adj.dtype, weight.dtype)
    stream_sz = stream_dtype.itemsize
    precision = (jax.lax.Precision.HIGHEST if stream_dtype == jnp.float32
                 else jax.lax.Precision.DEFAULT)

    if bias is None:
        bias = jnp.zeros((C_out,), jnp.float32)
    bias2d = bias.reshape(C_out, 1).astype(jnp.float32)

    # ---- generation-aware VMEM budgets ------------------------------------
    vmem_cap = _vmem_capacity_bytes()
    cores = _num_tensorcores()
    big_vmem = vmem_cap >= (100 << 20)                    # v4/v5e/v5p/v6e
    adj_db_cap = (48 << 20) if big_vmem else (16 << 20)   # adj tile, double buf
    pack_cap = (24 << 20) if big_vmem else (8 << 20)      # per-step total
    vmem_ceiling = (min(int(0.78 * vmem_cap), 100 << 20) if big_vmem
                    else int(0.70 * vmem_cap))

    # ---- column (lane) tiling of adj / out ---------------------------------
    tn_cap = tn_max if tn_max is not None else (1024 if big_vmem else 512)
    tn_cap = max(128, (tn_cap // 128) * 128)
    if N <= tn_cap:
        TN = N                                    # single full-extent tile
    else:
        TN = tn_cap                               # multiple of 128 (lane-dense)
        tn_floor = min(TN, 512 if stream_sz < 4 else 256)
        while TN - 128 >= tn_floor and 2 * N * TN * stream_sz > adj_db_cap:
            TN -= 128
    num_j = _cdiv(N, TN)                          # boundary block masked by Pallas

    # ---- channel-mix placement ---------------------------------------------
    # When C_out < C_in and adj is column-tiled, hoist the tiny W @ x matmul
    # out of the kernel (done once, not once per j tile).
    apply_w_in_kernel = not (C_out < C_in and num_j > 1)
    C_res = C_in if apply_w_in_kernel else C_out

    # ---- batch packing ------------------------------------------------------
    per_b = (2 * C_res * N * stream_sz            # resident x / (W@x) slab
             + 2 * N * TN * stream_sz             # adj column tile (dbl buf)
             + 2 * C_out * TN * out_sz)           # output tile (dbl buf)
    TB = max(1, min(B, 8, pack_cap // max(per_b, 1)))
    B_grid = _cdiv(B, TB)
    TB = _cdiv(B, B_grid)                         # same step count, min padding
    B_pad = B_grid * TB

    # v7x: both TensorCores shard the "parallel" axes; ensure >= 2 grid steps.
    if cores >= 2 and B_grid * num_j == 1:
        if TB >= 2:
            TB = _cdiv(TB, 2)
            B_grid = _cdiv(B, TB)
            TB = _cdiv(B, B_grid)
            B_pad = B_grid * TB
        elif N >= 256:
            TN = _round_up(_cdiv(N, 2), 128)
            num_j = _cdiv(N, TN)
    # TODO(synk): for very large N on v7x (64 MiB VMEM) add a K-tiling
    # (contraction) grid axis with an f32 accumulator so VMEM use is bounded
    # independent of N instead of relying on the TN shrink loop alone.

    # ---- operands in streaming dtype ---------------------------------------
    adj_s = adj.astype(stream_dtype)
    if apply_w_in_kernel:
        y = x.astype(stream_dtype)
        w_s = weight.astype(stream_dtype)
    else:
        # Tiny (C_out, C_in) x (C_in, N) matmul, hoisted out of the kernel.
        y = jnp.einsum("oc,bcn->bon",
                       weight.astype(jnp.float32), x.astype(jnp.float32),
                       precision=jax.lax.Precision.HIGHEST).astype(stream_dtype)
        w_s = None

    if B_pad > B:                                 # minimal batch-dim zero pad
        y = jnp.pad(y, ((0, B_pad - B), (0, 0), (0, 0)))
        adj_s = jnp.pad(adj_s, ((0, B_pad - B), (0, 0), (0, 0)))

    # ---- specs / cost estimate / vmem limit ---------------------------------
    in_specs = [
        # x (or W@x): resident per batch-block, constant across the inner j axis
        pl.BlockSpec((TB, C_res, N), lambda bi, j: (bi, 0, 0)),
        # adj: streamed column tiles (dominant HBM traffic, software-pipelined)
        pl.BlockSpec((TB, N, TN), lambda bi, j: (bi, 0, j)),
    ]
    inputs = [y, adj_s]
    if apply_w_in_kernel:
        in_specs.append(pl.BlockSpec((C_out, C_in), lambda bi, j: (0, 0)))
        inputs.append(w_s)
    in_specs.append(pl.BlockSpec((C_out, 1), lambda bi, j: (0, 0)))
    inputs.append(bias2d)

    flops = 2 * B * C_res * N * N
    if apply_w_in_kernel:
        flops += 2 * B * C_out * C_in * N
    bytes_accessed = (B * N * N * stream_sz           # adj (dominant stream)
                      + B * C_res * N * stream_sz     # x / W@x slab
                      + B * C_out * N * out_sz        # output
                      + C_out * (C_in + 1) * 4)       # weight + bias
    cost = pl.CostEstimate(flops=int(flops), transcendentals=0,
                           bytes_accessed=int(bytes_accessed))

    vmem_needed = TB * per_b + 4 * C_out * (C_in + 1) * 4 + (4 << 20)
    vmem_limit = int(min(max(2 * vmem_needed, 32 << 20), vmem_ceiling))
    if vmem_limit < vmem_needed:
        vmem_limit = int(min(vmem_needed + (4 << 20), int(0.9 * vmem_cap)))

    kernel = _make_kernel(apply_w=apply_w_in_kernel, tb=TB, precision=precision)

    out = pl.pallas_call(
        kernel,
        out_shape=jax.ShapeDtypeStruct((B_pad, C_out, N), out_dtype),
        grid_spec=pltpu.PrefetchScalarGridSpec(
            num_scalar_prefetch=0,
            grid=(B_grid, num_j),
            in_specs=in_specs,
            out_specs=pl.BlockSpec((TB, C_out, TN), lambda bi, j: (bi, 0, j)),
        ),
        compiler_params=pltpu.CompilerParams(
            dimension_semantics=("parallel", "parallel"),
            vmem_limit_bytes=vmem_limit,
        ),
        cost_estimate=cost,
    )(*inputs)

    if B_pad > B:
        out = out[:B]
    return out


def _reference(adj, x, weight, bias):
    tmp = jnp.einsum("bcn,bnm->bcm", x.astype(jnp.float32),
                     adj.astype(jnp.float32),
                     precision=jax.lax.Precision.HIGHEST)
    out = jnp.einsum("oc,bcm->bom", weight.astype(jnp.float32), tmp,
                     precision=jax.lax.Precision.HIGHEST)
    return out + bias.astype(jnp.float32)[None, :, None]


if __name__ == "__main__":
    key = jax.random.PRNGKey(0)

    def make_inputs(k, B, C_in, C_out, N):
        kx, ka, kw, kb = jax.random.split(k, 4)
        x = jax.random.normal(kx, (B, C_in, N), dtype=jnp.float32)
        adj = jax.random.normal(ka, (B, N, N), dtype=jnp.float32)
        bound = 1.0 / (C_in ** 0.5)
        w = jax.random.uniform(kw, (C_out, C_in), jnp.float32, -bound, bound)
        b = jax.random.uniform(kb, (C_out,), jnp.float32, -bound, bound)
        return x, adj, w, b

    k1, k2, k3 = jax.random.split(key, 3)

    # 1) module-like small shapes: C_in <= C_out -> in-kernel channel mix
    x, adj, w, b = make_inputs(k1, 2, 4, 8, 16)
    out = jax.block_until_ready(graph_convolution(adj, x, w, b))
    ref = _reference(adj, x, w, b)
    assert out.shape == ref.shape
    assert jnp.allclose(out, ref, atol=2e-3, rtol=2e-3), "f32 small-shape mismatch"

    # 2) C_out < C_in with column-tiled adj (N=200, TN=128): hoisted W @ x and
    #    a masked boundary tile (no N padding, no post-kernel slice).
    x, adj, w, b = make_inputs(k2, 3, 8, 4, 200)
    out = jax.block_until_ready(graph_convolution(adj, x, w, b, tn_max=128))
    ref = _reference(adj, x, w, b)
    assert out.shape == ref.shape
    assert jnp.allclose(out, ref, atol=5e-3, rtol=5e-3), "tiled/hoisted-W mismatch"

    # 3) B not divisible by the packing factor -> minimal batch-padding path
    x, adj, w, b = make_inputs(k3, 9, 4, 6, 64)
    out = jax.block_until_ready(graph_convolution(adj, x, w, b))
    ref = _reference(adj, x, w, b)
    assert out.shape == ref.shape
    assert jnp.allclose(out, ref, atol=5e-3, rtol=5e-3), "batch-pad mismatch"

    # 4) bf16 streaming of adj (halves the dominant HBM traffic), f32 accumulate
    x, adj, w, b = make_inputs(k1, 2, 4, 8, 16)
    out_bf16 = jax.block_until_ready(
        graph_convolution(adj, x, w, b, compute_dtype=jnp.bfloat16))
    ref = _reference(adj, x, w, b)
    assert out_bf16.dtype == x.dtype
    assert jnp.allclose(out_bf16, ref, atol=1e-1, rtol=5e-2), "bf16 path mismatch"

    print("KERNEL_OK")
</pallas_src>

<mosaic_0001>
module attributes {stable_mosaic.version = 11 : i64} {
  func.func @kernel(%arg0: i32, %arg1: i32, %arg2: memref<2x4x16xf32, #tpu.memory_space<vmem>>, %arg3: memref<2x16x16xf32, #tpu.memory_space<vmem>>, %arg4: memref<8x4xf32, #tpu.memory_space<vmem>>, %arg5: memref<8x1xf32, #tpu.memory_space<vmem>>, %arg6: memref<2x8x16xf32, #tpu.memory_space<vmem>>) attributes {dimension_semantics = [#tpu.dimension_semantics<parallel>, #tpu.dimension_semantics<parallel>], iteration_bounds = array<i64: 1, 1>, scalar_prefetch = 0 : i64, scratch_operands = 0 : i64, tpu.core_type = #tpu.core_type<tc>, window_params = [{transform_indices = @transform_0, window_bounds = array<i64: 2, 4, 16>}, {transform_indices = @transform_1, window_bounds = array<i64: 2, 16, 16>}, {pipeline_mode = #tpu.pipeline_mode<synchronous>, transform_indices = @transform_2, window_bounds = array<i64: 8, 4>}, {pipeline_mode = #tpu.pipeline_mode<synchronous>, transform_indices = @transform_3, window_bounds = array<i64: 8, 1>}, {transform_indices = @transform_4, window_bounds = array<i64: 2, 8, 16>}]} {
    %c0 = arith.constant 0 : index
    %c0_0 = arith.constant 0 : index
    %0 = vector.load %arg4[%c0, %c0_0] : memref<8x4xf32, #tpu.memory_space<vmem>>, vector<8x4xf32>
    %c0_1 = arith.constant 0 : index
    %c0_2 = arith.constant 0 : index
    %1 = vector.load %arg5[%c0_1, %c0_2] : memref<8x1xf32, #tpu.memory_space<vmem>>, vector<8x1xf32>
    %2 = vector.shape_cast %1 : vector<8x1xf32> to vector<8x1xf32>
    %3 = vector.broadcast %2 : vector<8x1xf32> to vector<8x16xf32>
    %c0_3 = arith.constant 0 : index
    %c0_4 = arith.constant 0 : index
    %c0_5 = arith.constant 0 : index
    %4 = vector.load %arg2[%c0_3, %c0_4, %c0_5] : memref<2x4x16xf32, #tpu.memory_space<vmem>>, vector<1x4x16xf32>
    %5 = vector.shape_cast %4 : vector<1x4x16xf32> to vector<4x16xf32>
    %c0_6 = arith.constant 0 : index
    %c0_7 = arith.constant 0 : index
    %c0_8 = arith.constant 0 : index
    %6 = vector.load %arg3[%c0_6, %c0_7, %c0_8] : memref<2x16x16xf32, #tpu.memory_space<vmem>>, vector<1x16x16xf32>
    %7 = vector.shape_cast %6 : vector<1x16x16xf32> to vector<16x16xf32>
    %cst = arith.constant dense<0.000000e+00> : vector<4x16xf32>
    %8 = tpu.matmul %5, %7, %cst {dimension_numbers = #tpu.dot_dimension_numbers<[1], [0], [0], [1], [0, 0, 1, 1], [], []>, precision = #tpu.contract_precision<fp32>} : vector<4x16xf32>, vector<16x16xf32>, vector<4x16xf32> -> vector<4x16xf32>
    %cst_9 = arith.constant dense<0.000000e+00> : vector<8x16xf32>
    %9 = tpu.matmul %0, %8, %cst_9 {dimension_numbers = #tpu.dot_dimension_numbers<[1], [0], [0], [1], [0, 0, 1, 1], [], []>, precision = #tpu.contract_precision<fp32>} : vector<8x4xf32>, vector<4x16xf32>, vector<8x16xf32> -> vector<8x16xf32>
    %10 = arith.addf %9, %3 : vector<8x16xf32>
    %c0_10 = arith.constant 0 : index
    %c0_11 = arith.constant 0 : index
    %c0_12 = arith.constant 0 : index
    %11 = vector.load %arg6[%c0_10, %c0_11, %c0_12] : memref<2x8x16xf32, #tpu.memory_space<vmem>>, vector<1x8x16xf32>
    %12 = vector.shape_cast %11 : vector<1x8x16xf32> to vector<8x16xf32>
    %13 = vector.shape_cast %10 : vector<8x16xf32> to vector<1x8x16xf32>
    tpu.vector_store %arg6[%c0_10, %c0_11, %c0_12], %13 {strides = array<i32>} : memref<2x8x16xf32, #tpu.memory_space<vmem>>, vector<1x8x16xf32>,
    %c1 = arith.constant 1 : index
    %c0_13 = arith.constant 0 : index
    %c0_14 = arith.constant 0 : index
    %14 = vector.load %arg2[%c1, %c0_13, %c0_14] : memref<2x4x16xf32, #tpu.memory_space<vmem>>, vector<1x4x16xf32>
    %15 = vector.shape_cast %14 : vector<1x4x16xf32> to vector<4x16xf32>
    %c1_15 = arith.constant 1 : index
    %c0_16 = arith.constant 0 : index
    %c0_17 = arith.constant 0 : index
    %16 = vector.load %arg3[%c1_15, %c0_16, %c0_17] : memref<2x16x16xf32, #tpu.memory_space<vmem>>, vector<1x16x16xf32>
    %17 = vector.shape_cast %16 : vector<1x16x16xf32> to vector<16x16xf32>
    %cst_18 = arith.constant dense<0.000000e+00> : vector<4x16xf32>
    %18 = tpu.matmul %15, %17, %cst_18 {dimension_numbers = #tpu.dot_dimension_numbers<[1], [0], [0], [1], [0, 0, 1, 1], [], []>, precision = #tpu.contract_precision<fp32>} : vector<4x16xf32>, vector<16x16xf32>, vector<4x16xf32> -> vector<4x16xf32>
    %cst_19 = arith.constant dense<0.000000e+00> : vector<8x16xf32>
    %19 = tpu.matmul %0, %18, %cst_19 {dimension_numbers = #tpu.dot_dimension_numbers<[1], [0], [0], [1], [0, 0, 1, 1], [], []>, precision = #tpu.contract_precision<fp32>} : vector<8x4xf32>, vector<4x16xf32>, vector<8x16xf32> -> vector<8x16xf32>
    %20 = arith.addf %19, %3 : vector<8x16xf32>
    %c1_20 = arith.constant 1 : index
    %c0_21 = arith.constant 0 : index
    %c0_22 = arith.constant 0 : index
    %21 = vector.load %arg6[%c1_20, %c0_21, %c0_22] : memref<2x8x16xf32, #tpu.memory_space<vmem>>, vector<1x8x16xf32>
    %22 = vector.shape_cast %21 : vector<1x8x16xf32> to vector<8x16xf32>
    %23 = vector.shape_cast %20 : vector<8x16xf32> to vector<1x8x16xf32>
    tpu.vector_store %arg6[%c1_20, %c0_21, %c0_22], %23 {strides = array<i32>} : memref<2x8x16xf32, #tpu.memory_space<vmem>>, vector<1x8x16xf32>,
    return
  }
  func.func @transform_0(%arg0: i32, %arg1: i32) -> (i32, i32, i32) {
    %c0_i32 = arith.constant 0 : i32
    %c0_i32_0 = arith.constant 0 : i32
    %c0_i32_1 = arith.constant 0 : i32
    return %arg0, %c0_i32, %c0_i32_0 : i32, i32, i32
  }
  func.func @transform_1(%arg0: i32, %arg1: i32) -> (i32, i32, i32) {
    %c0_i32 = arith.constant 0 : i32
    %c0_i32_0 = arith.constant 0 : i32
    return %arg0, %c0_i32, %arg1 : i32, i32, i32
  }
  func.func @transform_2(%arg0: i32, %arg1: i32) -> (i32, i32) {
    %c0_i32 = arith.constant 0 : i32
    %c0_i32_0 = arith.constant 0 : i32
    %c0_i32_1 = arith.constant 0 : i32
    return %c0_i32, %c0_i32_0 : i32, i32
  }
  func.func @transform_3(%arg0: i32, %arg1: i32) -> (i32, i32) {
    %c0_i32 = arith.constant 0 : i32
    %c0_i32_0 = arith.constant 0 : i32
    %c0_i32_1 = arith.constant 0 : i32
    return %c0_i32, %c0_i32_0 : i32, i32
  }
  func.func @transform_4(%arg0: i32, %arg1: i32) -> (i32, i32, i32) {
    %c0_i32 = arith.constant 0 : i32
    %c0_i32_0 = arith.constant 0 : i32
    return %arg0, %c0_i32, %arg1 : i32, i32, i32
  }
}

</mosaic_0001>

<llo_original>
// kernel: tpu_custom_call.1
$region0: #{tpu_custom_call.1}
  #allocation0 [shape = 'u32[]', space=smem, size = 0x4, offset = 0x4, fixed_abs, tag = 'smem constant byte address 0x4 - core index']
  #allocation1 [shape = 'u32[144,128]{1,0:T(1,128)}', space=vmem, size = 0x12000, scoped, tag = 'internal scratch']
  %s0 = inlined_call_operand.vmem [shape: f32[2,4,16], index: 0, kind: input, shape index: {}]
  %s1 = inlined_call_operand.hbm [shape: f32[2,16,16], index: 1, kind: input, shape index: {}]
  %s2 = inlined_call_operand.vmem [shape: f32[8,4], index: 2, kind: input, shape index: {}]
  %s3 = inlined_call_operand.vmem [shape: f32[8,1], index: 3, kind: input, shape index: {}]
  %s4 = inlined_call_operand.hbm [shape: f32[2,8,16], index: 4, kind: output, shape index: {}]
  %s5 = sld [smem:[#allocation0]]
  $region30: #{tpu_custom_call.1} parent=0
    _
  %s7 = ssub.s32 1, %s5
  %s8 = scalar_select 0, %s7, %s5
  $region1: #{tpu_custom_call.1} parent=0
    #allocation2 [shape = 'u8[16384]{0}', space=vmem, size = 0x4000, scoped, tag = 'input window, operand 1, single buffered']
    #allocation3 [shape = 's32[1]{0}', space=sflag, size = 0x4, scoped, tag = 'scoped memory for tpu_custom_call.1']
    #allocation4 [shape = 's32[1]{0}', space=sflag, size = 0x4, scoped, tag = 'scoped memory for tpu_custom_call.1']
    #allocation5 [shape = 'u8[8192]{0}', space=vmem, size = 0x2000, scoped, tag = 'output window, operand 0, single buffered']
    %9 = vsyncpa [#allocation3], 0
    %10 = vsyncpa [#allocation4], 0
    // Predicated region
    $region2: #{tpu_custom_call.1} parent=1 // pred_check
      _
    $region3: #{tpu_custom_call.1} parent=1 // pred_check_branch
      %12 = sbr.rel (0) target = $region5
    $region4: #{tpu_custom_call.1} parent=1 // pred_region
      _
    $region5: #{tpu_custom_call.1} parent=1 // pred_fallthru
      _
    // Predicated region
    $region6: #{tpu_custom_call.1} parent=1 // pred_check
      _
    $region7: #{tpu_custom_call.1} parent=1 // pred_check_branch
      %14 = sbr.rel (0) target = $region9
    $region8: #{tpu_custom_call.1} parent=1 // pred_region
      %s16 = ssub.s32 512, 512
      %17 = vsyncadd [#allocation3], %s16
      %s18 = sshll.u32 [#allocation2], 4
      %s19 = int_to_ptr.vmem [resolvable:$true] %s18
      %24 = dma.hbm_to_vmem [thread:$0]  %s1, 512, %s19, [#allocation3], 128, 128, 8
    $region9: #{tpu_custom_call.1} parent=1 // pred_fallthru
      _
    // Predicated region
    $region10: #{tpu_custom_call.1} parent=1 // pred_check
      _
    $region11: #{tpu_custom_call.1} parent=1 // pred_check_branch
      %26 = sbr.rel (0) target = $region13
    $region12: #{tpu_custom_call.1} parent=1 // pred_region
      _
    $region13: #{tpu_custom_call.1} parent=1 // pred_fallthru
      _
    // Predicated region
    $region14: #{tpu_custom_call.1} parent=1 // pred_check
      _
    $region15: #{tpu_custom_call.1} parent=1 // pred_check_branch
      %28 = sbr.rel (0) target = $region17
    $region16: #{tpu_custom_call.1} parent=1 // pred_region
      _
    $region17: #{tpu_custom_call.1} parent=1 // pred_fallthru
      _
    // Predicated region
    $region18: #{tpu_custom_call.1} parent=1 // pred_check
      _
    $region19: #{tpu_custom_call.1} parent=1 // pred_check_branch
      %30 = sbr.rel (0) target = $region21
    $region20: #{tpu_custom_call.1} parent=1 // pred_region
      %31 = dma.done [#allocation3], 512
    $region21: #{tpu_custom_call.1} parent=1 // pred_fallthru
      _
    %v32 = vld [vmem:[%s2] sm:$0xff]
    %v33 = vld [vmem:[%s3] sm:$0xff]
    %35 = vset.pattern.permute.xlu0 0
    %36 = vperm.xlu0 %35, %v33
    %v37 = vpop.permute.xlu0 %36
    %v39 = vld [vmem:[%s0] sm:$0xf]
    %v40 = vld [vmem:[#allocation2] sm:$0xff]
    %v41 = vld [vmem:[#allocation2 + $0x8] sm:$0xff]
    %vm42 = vcmask 130048
    %v44 = vsel %vm42, %v39, 0
    %46 = vmatprep.subr.mxu0 0.0
    %47 = vmatpush1.msra.mxu0 0.0
    %48 = vmatprep.subr.mxu0 0.0
    %49 = vmatpush1.msra.mxu0 0.0
    %50 = vmatprep.subr.mxu0 0.0
    %51 = vmatpush1.msra.mxu0 0.0
    %52 = vmatprep.subr.mxu0 0.0
    %53 = vmatpush1.msra.mxu0 0.0
    %54 = vmatprep.subr.mxu0 0.0
    %55 = vmatpush1.msra.mxu0 0.0
    %56 = vmatprep.subr.mxu0 0.0
    %57 = vmatpush1.msra.mxu0 0.0
    %58 = vmatprep.subr.mxu0 0.0
    %59 = vmatpush1.msra.mxu0 0.0
    %60 = vmatprep.subr.mxu0 0.0
    %61 = vmatpush1.msra.mxu0 0.0
    %62 = vmatprep.subr.mxu0 0.0
    %63 = vmatpush1.msra.mxu0 0.0
    %64 = vmatprep.subr.mxu0 0.0
    %65 = vmatpush1.msra.mxu0 0.0
    %66 = vmatprep.subr.mxu0 0.0
    %67 = vmatpush1.msra.mxu0 0.0
    %68 = vmatprep.subr.mxu0 0.0
    %69 = vmatpush1.msra.mxu0 0.0
    %70 = vmatprep.subr.mxu0 0.0
    %71 = vmatpush1.msra.mxu0 0.0
    %72 = vmatprep.subr.mxu0 0.0
    %73 = vmatpush1.msra.mxu0 0.0
    %74 = vmatprep.subr.mxu0 0.0
    %v75 = vand.u32 %v41, 4294901760
    %76 = vmatpush1.msra.mxu0 %v75
    %77 = vmatprep.subr.mxu0 0.0
    %v78 = vand.u32 %v40, 4294901760
    %79 = vmatpush1.msra.mxu0 %v78
    %80 = vmatprep.subr.mxu0 0.0
    %81 = vmatpush2.msra.mxu0 0.0
    %82 = vmatprep.subr.mxu0 0.0
    %83 = vmatpush2.msra.mxu0 0.0
    %84 = vmatprep.subr.mxu0 0.0
    %85 = vmatpush2.msra.mxu0 0.0
    %86 = vmatprep.subr.mxu0 0.0
    %87 = vmatpush2.msra.mxu0 0.0
    %88 = vmatprep.subr.mxu0 0.0
    %89 = vmatpush2.msra.mxu0 0.0
    %90 = vmatprep.subr.mxu0 0.0
    %91 = vmatpush2.msra.mxu0 0.0
    %92 = vmatprep.subr.mxu0 0.0
    %93 = vmatpush2.msra.mxu0 0.0
    %94 = vmatprep.subr.mxu0 0.0
    %95 = vmatpush2.msra.mxu0 0.0
    %96 = vmatprep.subr.mxu0 0.0
    %97 = vmatpush2.msra.mxu0 0.0
    %98 = vmatprep.subr.mxu0 0.0
    %99 = vmatpush2.msra.mxu0 0.0
    %100 = vmatprep.subr.mxu0 0.0
    %101 = vmatpush2.msra.mxu0 0.0
    %102 = vmatprep.subr.mxu0 0.0
    %103 = vmatpush2.msra.mxu0 0.0
    %104 = vmatprep.subr.mxu0 0.0
    %105 = vmatpush2.msra.mxu0 0.0
    %106 = vmatprep.subr.mxu0 0.0
    %107 = vmatpush2.msra.mxu0 0.0
    %108 = vmatprep.subr.mxu0 0.0
    %109 = vmatpush2.msra.mxu0 0.0
    %110 = vmatprep.subr.mxu0 0.0
    %111 = vmatpush2.msra.mxu0 0.0
    %112 = vmatprep.mubr.f32.mxu0 0.0
    %v113 = vand.u32 %v44, 4294901760
    %v114 = vsub.f32 %v44, %v113
    %v115 = vand.u32 %v114, 4294901760
    %v116 = vsub.f32 %v114, %v115
    %v117 = vand.u32 %v116, 4294901760
    %118 = vmatmul.mubr.f32.gmra.mxu0 %v117
    %v119 = vpop.f32.mrf.mxu0
    %v120 = vadd.f32 0.0, %v119
    %v121 = vpop.f32.mrf.mxu0
    %122 = vdwg.mxu0
    %123 = vmatprep.subr.mxu0 0.0
    %124 = vmatpush1.msra.mxu0 0.0
    %125 = vmatprep.subr.mxu0 0.0
    %126 = vmatpush1.msra.mxu0 0.0
    %127 = vmatprep.subr.mxu0 0.0
    %128 = vmatpush1.msra.mxu0 0.0
    %129 = vmatprep.subr.mxu0 0.0
    %130 = vmatpush1.msra.mxu0 0.0
    %131 = vmatprep.subr.mxu0 0.0
    %132 = vmatpush1.msra.mxu0 0.0
    %133 = vmatprep.subr.mxu0 0.0
    %134 = vmatpush1.msra.mxu0 0.0
    %135 = vmatprep.subr.mxu0 0.0
    %136 = vmatpush1.msra.mxu0 0.0
    %137 = vmatprep.subr.mxu0 0.0
    %138 = vmatpush1.msra.mxu0 0.0
    %139 = vmatprep.subr.mxu0 0.0
    %140 = vmatpush1.msra.mxu0 0.0
    %141 = vmatprep.subr.mxu0 0.0
    %142 = vmatpush1.msra.mxu0 0.0
    %143 = vmatprep.subr.mxu0 0.0
    %144 = vmatpush1.msra.mxu0 0.0
    %145 = vmatprep.subr.mxu0 0.0
    %146 = vmatpush1.msra.mxu0 0.0
    %147 = vmatprep.subr.mxu0 0.0
    %148 = vmatpush1.msra.mxu0 0.0
    %149 = vmatprep.subr.mxu0 0.0
    %150 = vmatpush1.msra.mxu0 0.0
    %151 = vmatprep.subr.mxu0 0.0
    %v152 = vand.u32 %v41, 4294901760
    %v153 = vsub.f32 %v41, %v152
    %v154 = vand.u32 %v153, 4294901760
    %v155 = vsub.f32 %v153, %v154
    %v156 = vand.u32 %v155, 4294901760
    %157 = vmatpush1.msra.mxu0 %v156
    %158 = vmatprep.subr.mxu0 0.0
    %v159 = vand.u32 %v40, 4294901760
    %v160 = vsub.f32 %v40, %v159
    %v161 = vand.u32 %v160, 4294901760
    %v162 = vsub.f32 %v160, %v161
    %v163 = vand.u32 %v162, 4294901760
    %164 = vmatpush1.msra.mxu0 %v163
    %165 = vmatprep.subr.mxu0 0.0
    %166 = vmatpush2.msra.mxu0 0.0
    %167 = vmatprep.subr.mxu0 0.0
    %168 = vmatpush2.msra.mxu0 0.0
    %169 = vmatprep.subr.mxu0 0.0
    %170 = vmatpush2.msra.mxu0 0.0
    %171 = vmatprep.subr.mxu0 0.0
    %172 = vmatpush2.msra.mxu0 0.0
    %173 = vmatprep.subr.mxu0 0.0
    %174 = vmatpush2.msra.mxu0 0.0
    %175 = vmatprep.subr.mxu0 0.0
    %176 = vmatpush2.msra.mxu0 0.0
    %177 = vmatprep.subr.mxu0 0.0
    %178 = vmatpush2.msra.mxu0 0.0
    %179 = vmatprep.subr.mxu0 0.0
    %180 = vmatpush2.msra.mxu0 0.0
    %181 = vmatprep.subr.mxu0 0.0
    %182 = vmatpush2.msra.mxu0 0.0
    %183 = vmatprep.subr.mxu0 0.0
    %184 = vmatpush2.msra.mxu0 0.0
    %185 = vmatprep.subr.mxu0 0.0
    %186 = vmatpush2.msra.mxu0 0.0
    %187 = vmatprep.subr.mxu0 0.0
    %188 = vmatpush2.msra.mxu0 0.0
    %189 = vmatprep.subr.mxu0 0.0
    %190 = vmatpush2.msra.mxu0 0.0
    %191 = vmatprep.subr.mxu0 0.0
    %192 = vmatpush2.msra.mxu0 0.0
    %193 = vmatprep.subr.mxu0 0.0
    %194 = vmatpush2.msra.mxu0 0.0
    %195 = vmatprep.subr.mxu0 0.0
    %196 = vmatpush2.msra.mxu0 0.0
    %197 = vmatprep.mubr.f32.mxu0 0.0
    %v198 = vand.u32 %v44, 4294901760
    %199 = vmatmul.mubr.f32.gmra.mxu0 %v198
    %v200 = vpop.f32.mrf.mxu0
    %v201 = vadd.f32 %v120, %v200
    %v202 = vpop.f32.mrf.mxu0
    %203 = vdwg.mxu0
    %204 = vmatprep.subr.mxu0 0.0
    %205 = vmatpush1.msra.mxu0 0.0
    %206 = vmatprep.subr.mxu0 0.0
    %207 = vmatpush1.msra.mxu0 0.0
    %208 = vmatprep.subr.mxu0 0.0
    %209 = vmatpush1.msra.mxu0 0.0
    %210 = vmatprep.subr.mxu0 0.0
    %211 = vmatpush1.msra.mxu0 0.0
    %212 = vmatprep.subr.mxu0 0.0
    %213 = vmatpush1.msra.mxu0 0.0
    %214 = vmatprep.subr.mxu0 0.0
    %215 = vmatpush1.msra.mxu0 0.0
    %216 = vmatprep.subr.mxu0 0.0
    %217 = vmatpush1.msra.mxu0 0.0
    %218 = vmatprep.subr.mxu0 0.0
    %219 = vmatpush1.msra.mxu0 0.0
    %220 = vmatprep.subr.mxu0 0.0
    %221 = vmatpush1.msra.mxu0 0.0
    %222 = vmatprep.subr.mxu0 0.0
    %223 = vmatpush1.msra.mxu0 0.0
    %224 = vmatprep.subr.mxu0 0.0
    %225 = vmatpush1.msra.mxu0 0.0
    %226 = vmatprep.subr.mxu0 0.0
    %227 = vmatpush1.msra.mxu0 0.0
    %228 = vmatprep.subr.mxu0 0.0
    %229 = vmatpush1.msra.mxu0 0.0
    %230 = vmatprep.subr.mxu0 0.0
    %231 = vmatpush1.msra.mxu0 0.0
    %232 = vmatprep.subr.mxu0 0.0
    %v233 = vand.u32 %v41, 4294901760
    %v234 = vsub.f32 %v41, %v233
    %235 = vmatpush1.msra.mxu0 %v234
    %236 = vmatprep.subr.mxu0 0.0
    %v237 = vand.u32 %v40, 4294901760
    %v238 = vsub.f32 %v40, %v237
    %239 = vmatpush1.msra.mxu0 %v238
    %240 = vmatprep.subr.mxu0 0.0
    %241 = vmatpush2.msra.mxu0 0.0
    %242 = vmatprep.subr.mxu0 0.0
    %243 = vmatpush2.msra.mxu0 0.0
    %244 = vmatprep.subr.mxu0 0.0
    %245 = vmatpush2.msra.mxu0 0.0
    %246 = vmatprep.subr.mxu0 0.0
    %247 = vmatpush2.msra.mxu0 0.0
    %248 = vmatprep.subr.mxu0 0.0
    %249 = vmatpush2.msra.mxu0 0.0
    %250 = vmatprep.subr.mxu0 0.0
    %251 = vmatpush2.msra.mxu0 0.0
    %252 = vmatprep.subr.mxu0 0.0
    %253 = vmatpush2.msra.mxu0 0.0
    %254 = vmatprep.subr.mxu0 0.0
    %255 = vmatpush2.msra.mxu0 0.0
    %256 = vmatprep.subr.mxu0 0.0
    %257 = vmatpush2.msra.mxu0 0.0
    %258 = vmatprep.subr.mxu0 0.0
    %259 = vmatpush2.msra.mxu0 0.0
    %260 = vmatprep.subr.mxu0 0.0
    %261 = vmatpush2.msra.mxu0 0.0
    %262 = vmatprep.subr.mxu0 0.0
    %263 = vmatpush2.msra.mxu0 0.0
    %264 = vmatprep.subr.mxu0 0.0
    %265 = vmatpush2.msra.mxu0 0.0
    %266 = vmatprep.subr.mxu0 0.0
    %267 = vmatpush2.msra.mxu0 0.0
    %268 = vmatprep.subr.mxu0 0.0
    %269 = vmatpush2.msra.mxu0 0.0
    %270 = vmatprep.subr.mxu0 0.0
    %271 = vmatpush2.msra.mxu0 0.0
    %272 = vmatprep.mubr.f32.mxu0 0.0
    %v273 = vand.u32 %v44, 4294901760
    %v274 = vsub.f32 %v44, %v273
    %275 = vmatmul.mubr.f32.gmra.mxu0 %v274
    %v276 = vpop.f32.mrf.mxu0
    %v277 = vadd.f32 %v201, %v276
    %v278 = vpop.f32.mrf.mxu0
    %279 = vdwg.mxu0
    %280 = vmatprep.subr.mxu0 0.0
    %281 = vmatpush1.msra.mxu0 0.0
    %282 = vmatprep.subr.mxu0 0.0
    %283 = vmatpush1.msra.mxu0 0.0
    %284 = vmatprep.subr.mxu0 0.0
    %285 = vmatpush1.msra.mxu0 0.0
    %286 = vmatprep.subr.mxu0 0.0
    %287 = vmatpush1.msra.mxu0 0.0
    %288 = vmatprep.subr.mxu0 0.0
    %289 = vmatpush1.msra.mxu0 0.0
    %290 = vmatprep.subr.mxu0 0.0
    %291 = vmatpush1.msra.mxu0 0.0
    %292 = vmatprep.subr.mxu0 0.0
    %293 = vmatpush1.msra.mxu0 0.0
    %294 = vmatprep.subr.mxu0 0.0
    %295 = vmatpush1.msra.mxu0 0.0
    %296 = vmatprep.subr.mxu0 0.0
    %297 = vmatpush1.msra.mxu0 0.0
    %298 = vmatprep.subr.mxu0 0.0
    %299 = vmatpush1.msra.mxu0 0.0
    %300 = vmatprep.subr.mxu0 0.0
    %301 = vmatpush1.msra.mxu0 0.0
    %302 = vmatprep.subr.mxu0 0.0
    %303 = vmatpush1.msra.mxu0 0.0
    %304 = vmatprep.subr.mxu0 0.0
    %305 = vmatpush1.msra.mxu0 0.0
    %306 = vmatprep.subr.mxu0 0.0
    %307 = vmatpush1.msra.mxu0 0.0
    %308 = vmatprep.subr.mxu0 0.0
    %v309 = vand.u32 %v41, 4294901760
    %310 = vmatpush1.msra.mxu0 %v309
    %311 = vmatprep.subr.mxu0 0.0
    %v312 = vand.u32 %v40, 4294901760
    %313 = vmatpush1.msra.mxu0 %v312
    %314 = vmatprep.subr.mxu0 0.0
    %315 = vmatpush2.msra.mxu0 0.0
    %316 = vmatprep.subr.mxu0 0.0
    %317 = vmatpush2.msra.mxu0 0.0
    %318 = vmatprep.subr.mxu0 0.0
    %319 = vmatpush2.msra.mxu0 0.0
    %320 = vmatprep.subr.mxu0 0.0
    %321 = vmatpush2.msra.mxu0 0.0
    %322 = vmatprep.subr.mxu0 0.0
    %323 = vmatpush2.msra.mxu0 0.0
    %324 = vmatprep.subr.mxu0 0.0
    %325 = vmatpush2.msra.mxu0 0.0
    %326 = vmatprep.subr.mxu0 0.0
    %327 = vmatpush2.msra.mxu0 0.0
    %328 = vmatprep.subr.mxu0 0.0
    %329 = vmatpush2.msra.mxu0 0.0
    %330 = vmatprep.subr.mxu0 0.0
    %331 = vmatpush2.msra.mxu0 0.0
    %332 = vmatprep.subr.mxu0 0.0
    %333 = vmatpush2.msra.mxu0 0.0
    %334 = vmatprep.subr.mxu0 0.0
    %335 = vmatpush2.msra.mxu0 0.0
    %336 = vmatprep.subr.mxu0 0.0
    %337 = vmatpush2.msra.mxu0 0.0
    %338 = vmatprep.subr.mxu0 0.0
    %339 = vmatpush2.msra.mxu0 0.0
    %340 = vmatprep.subr.mxu0 0.0
    %341 = vmatpush2.msra.mxu0 0.0
    %342 = vmatprep.subr.mxu0 0.0
    %343 = vmatpush2.msra.mxu0 0.0
    %344 = vmatprep.subr.mxu0 0.0
    %345 = vmatpush2.msra.mxu0 0.0
    %346 = vmatprep.mubr.f32.mxu0 0.0
    %v347 = vand.u32 %v44, 4294901760
    %v348 = vsub.f32 %v44, %v347
    %v349 = vand.u32 %v348, 4294901760
    %350 = vmatmul.mubr.f32.gmra.mxu0 %v349
    %v351 = vpop.f32.mrf.mxu0
    %v352 = vadd.f32 %v277, %v351
    %v353 = vpop.f32.mrf.mxu0
    %354 = vdwg.mxu0
    %355 = vmatprep.subr.mxu0 0.0
    %356 = vmatpush1.msra.mxu0 0.0
    %357 = vmatprep.subr.mxu0 0.0
    %358 = vmatpush1.msra.mxu0 0.0
    %359 = vmatprep.subr.mxu0 0.0
    %360 = vmatpush1.msra.mxu0 0.0
    %361 = vmatprep.subr.mxu0 0.0
    %362 = vmatpush1.msra.mxu0 0.0
    %363 = vmatprep.subr.mxu0 0.0
    %364 = vmatpush1.msra.mxu0 0.0
    %365 = vmatprep.subr.mxu0 0.0
    %366 = vmatpush1.msra.mxu0 0.0
    %367 = vmatprep.subr.mxu0 0.0
    %368 = vmatpush1.msra.mxu0 0.0
    %369 = vmatprep.subr.mxu0 0.0
    %370 = vmatpush1.msra.mxu0 0.0
    %371 = vmatprep.subr.mxu0 0.0
    %372 = vmatpush1.msra.mxu0 0.0
    %373 = vmatprep.subr.mxu0 0.0
    %374 = vmatpush1.msra.mxu0 0.0
    %375 = vmatprep.subr.mxu0 0.0
    %376 = vmatpush1.msra.mxu0 0.0
    %377 = vmatprep.subr.mxu0 0.0
    %378 = vmatpush1.msra.mxu0 0.0
    %379 = vmatprep.subr.mxu0 0.0
    %380 = vmatpush1.msra.mxu0 0.0
    %381 = vmatprep.subr.mxu0 0.0
    %382 = vmatpush1.msra.mxu0 0.0
    %383 = vmatprep.subr.mxu0 0.0
    %v384 = vand.u32 %v41, 4294901760
    %v385 = vsub.f32 %v41, %v384
    %v386 = vand.u32 %v385, 4294901760
    %387 = vmatpush1.msra.mxu0 %v386
    %388 = vmatprep.subr.mxu0 0.0
    %v389 = vand.u32 %v40, 4294901760
    %v390 = vsub.f32 %v40, %v389
    %v391 = vand.u32 %v390, 4294901760
    %392 = vmatpush1.msra.mxu0 %v391
    %393 = vmatprep.subr.mxu0 0.0
    %394 = vmatpush2.msra.mxu0 0.0
    %395 = vmatprep.subr.mxu0 0.0
    %396 = vmatpush2.msra.mxu0 0.0
    %397 = vmatprep.subr.mxu0 0.0
    %398 = vmatpush2.msra.mxu0 0.0
    %399 = vmatprep.subr.mxu0 0.0
    %400 = vmatpush2.msra.mxu0 0.0
    %401 = vmatprep.subr.mxu0 0.0
    %402 = vmatpush2.msra.mxu0 0.0
    %403 = vmatprep.subr.mxu0 0.0
    %404 = vmatpush2.msra.mxu0 0.0
    %405 = vmatprep.subr.mxu0 0.0
    %406 = vmatpush2.msra.mxu0 0.0
    %407 = vmatprep.subr.mxu0 0.0
    %408 = vmatpush2.msra.mxu0 0.0
    %409 = vmatprep.subr.mxu0 0.0
    %410 = vmatpush2.msra.mxu0 0.0
    %411 = vmatprep.subr.mxu0 0.0
    %412 = vmatpush2.msra.mxu0 0.0
    %413 = vmatprep.subr.mxu0 0.0
    %414 = vmatpush2.msra.mxu0 0.0
    %415 = vmatprep.subr.mxu0 0.0
    %416 = vmatpush2.msra.mxu0 0.0
    %417 = vmatprep.subr.mxu0 0.0
    %418 = vmatpush2.msra.mxu0 0.0
    %419 = vmatprep.subr.mxu0 0.0
    %420 = vmatpush2.msra.mxu0 0.0
    %421 = vmatprep.subr.mxu0 0.0
    %422 = vmatpush2.msra.mxu0 0.0
    %423 = vmatprep.subr.mxu0 0.0
    %424 = vmatpush2.msra.mxu0 0.0
    %425 = vmatprep.mubr.f32.mxu0 0.0
    %v426 = vand.u32 %v44, 4294901760
    %427 = vmatmul.mubr.f32.gmra.mxu0 %v426
    %v428 = vpop.f32.mrf.mxu0
    %v429 = vadd.f32 %v352, %v428
    %v430 = vpop.f32.mrf.mxu0
    %431 = vdwg.mxu0
    %432 = vmatprep.subr.mxu0 0.0
    %433 = vmatpush1.msra.mxu0 0.0
    %434 = vmatprep.subr.mxu0 0.0
    %435 = vmatpush1.msra.mxu0 0.0
    %436 = vmatprep.subr.mxu0 0.0
    %437 = vmatpush1.msra.mxu0 0.0
    %438 = vmatprep.subr.mxu0 0.0
    %439 = vmatpush1.msra.mxu0 0.0
    %440 = vmatprep.subr.mxu0 0.0
    %441 = vmatpush1.msra.mxu0 0.0
    %442 = vmatprep.subr.mxu0 0.0
    %443 = vmatpush1.msra.mxu0 0.0
    %444 = vmatprep.subr.mxu0 0.0
    %445 = vmatpush1.msra.mxu0 0.0
    %446 = vmatprep.subr.mxu0 0.0
    %447 = vmatpush1.msra.mxu0 0.0
    %448 = vmatprep.subr.mxu0 0.0
    %449 = vmatpush1.msra.mxu0 0.0
    %450 = vmatprep.subr.mxu0 0.0
    %451 = vmatpush1.msra.mxu0 0.0
    %452 = vmatprep.subr.mxu0 0.0
    %453 = vmatpush1.msra.mxu0 0.0
    %454 = vmatprep.subr.mxu0 0.0
    %455 = vmatpush1.msra.mxu0 0.0
    %456 = vmatprep.subr.mxu0 0.0
    %457 = vmatpush1.msra.mxu0 0.0
    %458 = vmatprep.subr.mxu0 0.0
    %459 = vmatpush1.msra.mxu0 0.0
    %460 = vmatprep.subr.mxu0 0.0
    %v461 = vand.u32 %v41, 4294901760
    %462 = vmatpush1.msra.mxu0 %v461
    %463 = vmatprep.subr.mxu0 0.0
    %v464 = vand.u32 %v40, 4294901760
    %465 = vmatpush1.msra.mxu0 %v464
    %466 = vmatprep.subr.mxu0 0.0
    %467 = vmatpush2.msra.mxu0 0.0
    %468 = vmatprep.subr.mxu0 0.0
    %469 = vmatpush2.msra.mxu0 0.0
    %470 = vmatprep.subr.mxu0 0.0
    %471 = vmatpush2.msra.mxu0 0.0
    %472 = vmatprep.subr.mxu0 0.0
    %473 = vmatpush2.msra.mxu0 0.0
    %474 = vmatprep.subr.mxu0 0.0
    %475 = vmatpush2.msra.mxu0 0.0
    %476 = vmatprep.subr.mxu0 0.0
    %477 = vmatpush2.msra.mxu0 0.0
    %478 = vmatprep.subr.mxu0 0.0
    %479 = vmatpush2.msra.mxu0 0.0
    %480 = vmatprep.subr.mxu0 0.0
    %481 = vmatpush2.msra.mxu0 0.0
    %482 = vmatprep.subr.mxu0 0.0
    %483 = vmatpush2.msra.mxu0 0.0
    %484 = vmatprep.subr.mxu0 0.0
    %485 = vmatpush2.msra.mxu0 0.0
    %486 = vmatprep.subr.mxu0 0.0
    %487 = vmatpush2.msra.mxu0 0.0
    %488 = vmatprep.subr.mxu0 0.0
    %489 = vmatpush2.msra.mxu0 0.0
    %490 = vmatprep.subr.mxu0 0.0
    %491 = vmatpush2.msra.mxu0 0.0
    %492 = vmatprep.subr.mxu0 0.0
    %493 = vmatpush2.msra.mxu0 0.0
    %494 = vmatprep.subr.mxu0 0.0
    %495 = vmatpush2.msra.mxu0 0.0
    %496 = vmatprep.subr.mxu0 0.0
    %497 = vmatpush2.msra.mxu0 0.0
    %498 = vmatprep.mubr.f32.mxu0 0.0
    %v499 = vand.u32 %v44, 4294901760
    %500 = vmatmul.mubr.f32.gmra.mxu0 %v499
    %v501 = vpop.f32.mrf.mxu0
    %v502 = vadd.f32 %v429, %v501
    %v503 = vpop.f32.mrf.mxu0
    %504 = vdwg.mxu0
    %vm505 = vcmask 31744
    %v507 = vsel %vm505, %v32, 0
    %vm509 = vcmask 1043456
    %v511 = vsel %vm509, %v502, 0
    %513 = vmatprep.subr.mxu0 0.0
    %514 = vmatpush1.msra.mxu0 0.0
    %515 = vmatprep.subr.mxu0 0.0
    %516 = vmatpush1.msra.mxu0 0.0
    %517 = vmatprep.subr.mxu0 0.0
    %518 = vmatpush1.msra.mxu0 0.0
    %519 = vmatprep.subr.mxu0 0.0
    %520 = vmatpush1.msra.mxu0 0.0
    %521 = vmatprep.subr.mxu0 0.0
    %522 = vmatpush1.msra.mxu0 0.0
    %523 = vmatprep.subr.mxu0 0.0
    %524 = vmatpush1.msra.mxu0 0.0
    %525 = vmatprep.subr.mxu0 0.0
    %526 = vmatpush1.msra.mxu0 0.0
    %527 = vmatprep.subr.mxu0 0.0
    %528 = vmatpush1.msra.mxu0 0.0
    %529 = vmatprep.subr.mxu0 0.0
    %530 = vmatpush1.msra.mxu0 0.0
    %531 = vmatprep.subr.mxu0 0.0
    %532 = vmatpush1.msra.mxu0 0.0
    %533 = vmatprep.subr.mxu0 0.0
    %534 = vmatpush1.msra.mxu0 0.0
    %535 = vmatprep.subr.mxu0 0.0
    %536 = vmatpush1.msra.mxu0 0.0
    %537 = vmatprep.subr.mxu0 0.0
    %538 = vmatpush1.msra.mxu0 0.0
    %539 = vmatprep.subr.mxu0 0.0
    %540 = vmatpush1.msra.mxu0 0.0
    %541 = vmatprep.subr.mxu0 0.0
    %542 = vmatpush1.msra.mxu0 0.0
    %543 = vmatprep.subr.mxu0 0.0
    %v544 = vand.u32 %v511, 4294901760
    %545 = vmatpush1.msra.mxu0 %v544
    %546 = vmatprep.subr.mxu0 0.0
    %547 = vmatpush2.msra.mxu0 0.0
    %548 = vmatprep.subr.mxu0 0.0
    %549 = vmatpush2.msra.mxu0 0.0
    %550 = vmatprep.subr.mxu0 0.0
    %551 = vmatpush2.msra.mxu0 0.0
    %552 = vmatprep.subr.mxu0 0.0
    %553 = vmatpush2.msra.mxu0 0.0
    %554 = vmatprep.subr.mxu0 0.0
    %555 = vmatpush2.msra.mxu0 0.0
    %556 = vmatprep.subr.mxu0 0.0
    %557 = vmatpush2.msra.mxu0 0.0
    %558 = vmatprep.subr.mxu0 0.0
    %559 = vmatpush2.msra.mxu0 0.0
    %560 = vmatprep.subr.mxu0 0.0
    %561 = vmatpush2.msra.mxu0 0.0
    %562 = vmatprep.subr.mxu0 0.0
    %563 = vmatpush2.msra.mxu0 0.0
    %564 = vmatprep.subr.mxu0 0.0
    %565 = vmatpush2.msra.mxu0 0.0
    %566 = vmatprep.subr.mxu0 0.0
    %567 = vmatpush2.msra.mxu0 0.0
    %568 = vmatprep.subr.mxu0 0.0
    %569 = vmatpush2.msra.mxu0 0.0
    %570 = vmatprep.subr.mxu0 0.0
    %571 = vmatpush2.msra.mxu0 0.0
    %572 = vmatprep.subr.mxu0 0.0
    %573 = vmatpush2.msra.mxu0 0.0
    %574 = vmatprep.subr.mxu0 0.0
    %575 = vmatpush2.msra.mxu0 0.0
    %576 = vmatprep.subr.mxu0 0.0
    %577 = vmatpush2.msra.mxu0 0.0
    %578 = vmatprep.mubr.f32.mxu0 0.0
    %v579 = vand.u32 %v507, 4294901760
    %v580 = vsub.f32 %v507, %v579
    %v581 = vand.u32 %v580, 4294901760
    %v582 = vsub.f32 %v580, %v581
    %v583 = vand.u32 %v582, 4294901760
    %584 = vmatmul.mubr.f32.gmra.mxu0 %v583
    %v585 = vpop.f32.mrf.mxu0
    %v586 = vadd.f32 %v37, %v585
    %v587 = vpop.f32.mrf.mxu0
    %588 = vdwg.mxu0
    %589 = vmatprep.subr.mxu0 0.0
    %590 = vmatpush1.msra.mxu0 0.0
    %591 = vmatprep.subr.mxu0 0.0
    %592 = vmatpush1.msra.mxu0 0.0
    %593 = vmatprep.subr.mxu0 0.0
    %594 = vmatpush1.msra.mxu0 0.0
    %595 = vmatprep.subr.mxu0 0.0
    %596 = vmatpush1.msra.mxu0 0.0
    %597 = vmatprep.subr.mxu0 0.0
    %598 = vmatpush1.msra.mxu0 0.0
    %599 = vmatprep.subr.mxu0 0.0
    %600 = vmatpush1.msra.mxu0 0.0
    %601 = vmatprep.subr.mxu0 0.0
    %602 = vmatpush1.msra.mxu0 0.0
    %603 = vmatprep.subr.mxu0 0.0
    %604 = vmatpush1.msra.mxu0 0.0
    %605 = vmatprep.subr.mxu0 0.0
    %606 = vmatpush1.msra.mxu0 0.0
    %607 = vmatprep.subr.mxu0 0.0
    %608 = vmatpush1.msra.mxu0 0.0
    %609 = vmatprep.subr.mxu0 0.0
    %610 = vmatpush1.msra.mxu0 0.0
    %611 = vmatprep.subr.mxu0 0.0
    %612 = vmatpush1.msra.mxu0 0.0
    %613 = vmatprep.subr.mxu0 0.0
    %614 = vmatpush1.msra.mxu0 0.0
    %615 = vmatprep.subr.mxu0 0.0
    %616 = vmatpush1.msra.mxu0 0.0
    %617 = vmatprep.subr.mxu0 0.0
    %618 = vmatpush1.msra.mxu0 0.0
    %619 = vmatprep.subr.mxu0 0.0
    %v620 = vand.u32 %v511, 4294901760
    %v621 = vsub.f32 %v511, %v620
    %v622 = vand.u32 %v621, 4294901760
    %v623 = vsub.f32 %v621, %v622
    %v624 = vand.u32 %v623, 4294901760
    %625 = vmatpush1.msra.mxu0 %v624
    %626 = vmatprep.subr.mxu0 0.0
    %627 = vmatpush2.msra.mxu0 0.0
    %628 = vmatprep.subr.mxu0 0.0
    %629 = vmatpush2.msra.mxu0 0.0
    %630 = vmatprep.subr.mxu0 0.0
    %631 = vmatpush2.msra.mxu0 0.0
    %632 = vmatprep.subr.mxu0 0.0
    %633 = vmatpush2.msra.mxu0 0.0
    %634 = vmatprep.subr.mxu0 0.0
    %635 = vmatpush2.msra.mxu0 0.0
    %636 = vmatprep.subr.mxu0 0.0
    %637 = vmatpush2.msra.mxu0 0.0
    %638 = vmatprep.subr.mxu0 0.0
    %639 = vmatpush2.msra.mxu0 0.0
    %640 = vmatprep.subr.mxu0 0.0
    %641 = vmatpush2.msra.mxu0 0.0
    %642 = vmatprep.subr.mxu0 0.0
    %643 = vmatpush2.msra.mxu0 0.0
    %644 = vmatprep.subr.mxu0 0.0
    %645 = vmatpush2.msra.mxu0 0.0
    %646 = vmatprep.subr.mxu0 0.0
    %647 = vmatpush2.msra.mxu0 0.0
    %648 = vmatprep.subr.mxu0 0.0
    %649 = vmatpush2.msra.mxu0 0.0
    %650 = vmatprep.subr.mxu0 0.0
    %651 = vmatpush2.msra.mxu0 0.0
    %652 = vmatprep.subr.mxu0 0.0
    %653 = vmatpush2.msra.mxu0 0.0
    %654 = vmatprep.subr.mxu0 0.0
    %655 = vmatpush2.msra.mxu0 0.0
    %656 = vmatprep.subr.mxu0 0.0
    %657 = vmatpush2.msra.mxu0 0.0
    %658 = vmatprep.mubr.f32.mxu0 0.0
    %v659 = vand.u32 %v507, 4294901760
    %660 = vmatmul.mubr.f32.gmra.mxu0 %v659
    %v661 = vpop.f32.mrf.mxu0
    %v662 = vadd.f32 %v586, %v661
    %v663 = vpop.f32.mrf.mxu0
    %664 = vdwg.mxu0
    %665 = vmatprep.subr.mxu0 0.0
    %666 = vmatpush1.msra.mxu0 0.0
    %667 = vmatprep.subr.mxu0 0.0
    %668 = vmatpush1.msra.mxu0 0.0
    %669 = vmatprep.subr.mxu0 0.0
    %670 = vmatpush1.msra.mxu0 0.0
    %671 = vmatprep.subr.mxu0 0.0
    %672 = vmatpush1.msra.mxu0 0.0
    %673 = vmatprep.subr.mxu0 0.0
    %674 = vmatpush1.msra.mxu0 0.0
    %675 = vmatprep.subr.mxu0 0.0
    %676 = vmatpush1.msra.mxu0 0.0
    %677 = vmatprep.subr.mxu0 0.0
    %678 = vmatpush1.msra.mxu0 0.0
    %679 = vmatprep.subr.mxu0 0.0
    %680 = vmatpush1.msra.mxu0 0.0
    %681 = vmatprep.subr.mxu0 0.0
    %682 = vmatpush1.msra.mxu0 0.0
    %683 = vmatprep.subr.mxu0 0.0
    %684 = vmatpush1.msra.mxu0 0.0
    %685 = vmatprep.subr.mxu0 0.0
    %686 = vmatpush1.msra.mxu0 0.0
    %687 = vmatprep.subr.mxu0 0.0
    %688 = vmatpush1.msra.mxu0 0.0
    %689 = vmatprep.subr.mxu0 0.0
    %690 = vmatpush1.msra.mxu0 0.0
    %691 = vmatprep.subr.mxu0 0.0
    %692 = vmatpush1.msra.mxu0 0.0
    %693 = vmatprep.subr.mxu0 0.0
    %694 = vmatpush1.msra.mxu0 0.0
    %695 = vmatprep.subr.mxu0 0.0
    %v696 = vand.u32 %v511, 4294901760
    %v697 = vsub.f32 %v511, %v696
    %698 = vmatpush1.msra.mxu0 %v697
    %699 = vmatprep.subr.mxu0 0.0
    %700 = vmatpush2.msra.mxu0 0.0
    %701 = vmatprep.subr.mxu0 0.0
    %702 = vmatpush2.msra.mxu0 0.0
    %703 = vmatprep.subr.mxu0 0.0
    %704 = vmatpush2.msra.mxu0 0.0
    %705 = vmatprep.subr.mxu0 0.0
    %706 = vmatpush2.msra.mxu0 0.0
    %707 = vmatprep.subr.mxu0 0.0
    %708 = vmatpush2.msra.mxu0 0.0
    %709 = vmatprep.subr.mxu0 0.0
    %710 = vmatpush2.msra.mxu0 0.0
    %711 = vmatprep.subr.mxu0 0.0
    %712 = vmatpush2.msra.mxu0 0.0
    %713 = vmatprep.subr.mxu0 0.0
    %714 = vmatpush2.msra.mxu0 0.0
    %715 = vmatprep.subr.mxu0 0.0
    %716 = vmatpush2.msra.mxu0 0.0
    %717 = vmatprep.subr.mxu0 0.0
    %718 = vmatpush2.msra.mxu0 0.0
    %719 = vmatprep.subr.mxu0 0.0
    %720 = vmatpush2.msra.mxu0 0.0
    %721 = vmatprep.subr.mxu0 0.0
    %722 = vmatpush2.msra.mxu0 0.0
    %723 = vmatprep.subr.mxu0 0.0
    %724 = vmatpush2.msra.mxu0 0.0
    %725 = vmatprep.subr.mxu0 0.0
    %726 = vmatpush2.msra.mxu0 0.0
    %727 = vmatprep.subr.mxu0 0.0
    %728 = vmatpush2.msra.mxu0 0.0
    %729 = vmatprep.subr.mxu0 0.0
    %730 = vmatpush2.msra.mxu0 0.0
    %731 = vmatprep.mubr.f32.mxu0 0.0
    %v732 = vand.u32 %v507, 4294901760
    %v733 = vsub.f32 %v507, %v732
    %734 = vmatmul.mubr.f32.gmra.mxu0 %v733
    %v735 = vpop.f32.mrf.mxu0
    %v736 = vadd.f32 %v662, %v735
    %v737 = vpop.f32.mrf.mxu0
    %738 = vdwg.mxu0
    %739 = vmatprep.subr.mxu0 0.0
    %740 = vmatpush1.msra.mxu0 0.0
    %741 = vmatprep.subr.mxu0 0.0
    %742 = vmatpush1.msra.mxu0 0.0
    %743 = vmatprep.subr.mxu0 0.0
    %744 = vmatpush1.msra.mxu0 0.0
    %745 = vmatprep.subr.mxu0 0.0
    %746 = vmatpush1.msra.mxu0 0.0
    %747 = vmatprep.subr.mxu0 0.0
    %748 = vmatpush1.msra.mxu0 0.0
    %749 = vmatprep.subr.mxu0 0.0
    %750 = vmatpush1.msra.mxu0 0.0
    %751 = vmatprep.subr.mxu0 0.0
    %752 = vmatpush1.msra.mxu0 0.0
    %753 = vmatprep.subr.mxu0 0.0
    %754 = vmatpush1.msra.mxu0 0.0
    %755 = vmatprep.subr.mxu0 0.0
    %756 = vmatpush1.msra.mxu0 0.0
    %757 = vmatprep.subr.mxu0 0.0
    %758 = vmatpush1.msra.mxu0 0.0
    %759 = vmatprep.subr.mxu0 0.0
    %760 = vmatpush1.msra.mxu0 0.0
    %761 = vmatprep.subr.mxu0 0.0
    %762 = vmatpush1.msra.mxu0 0.0
    %763 = vmatprep.subr.mxu0 0.0
    %764 = vmatpush1.msra.mxu0 0.0
    %765 = vmatprep.subr.mxu0 0.0
    %766 = vmatpush1.msra.mxu0 0.0
    %767 = vmatprep.subr.mxu0 0.0
    %768 = vmatpush1.msra.mxu0 0.0
    %769 = vmatprep.subr.mxu0 0.0
    %v770 = vand.u32 %v511, 4294901760
    %771 = vmatpush1.msra.mxu0 %v770
    %772 = vmatprep.subr.mxu0 0.0
    %773 = vmatpush2.msra.mxu0 0.0
    %774 = vmatprep.subr.mxu0 0.0
    %775 = vmatpush2.msra.mxu0 0.0
    %776 = vmatprep.subr.mxu0 0.0
    %777 = vmatpush2.msra.mxu0 0.0
    %778 = vmatprep.subr.mxu0 0.0
    %779 = vmatpush2.msra.mxu0 0.0
    %780 = vmatprep.subr.mxu0 0.0
    %781 = vmatpush2.msra.mxu0 0.0
    %782 = vmatprep.subr.mxu0 0.0
    %783 = vmatpush2.msra.mxu0 0.0
    %784 = vmatprep.subr.mxu0 0.0
    %785 = vmatpush2.msra.mxu0 0.0
    %786 = vmatprep.subr.mxu0 0.0
    %787 = vmatpush2.msra.mxu0 0.0
    %788 = vmatprep.subr.mxu0 0.0
    %789 = vmatpush2.msra.mxu0 0.0
    %790 = vmatprep.subr.mxu0 0.0
    %791 = vmatpush2.msra.mxu0 0.0
    %792 = vmatprep.subr.mxu0 0.0
    %793 = vmatpush2.msra.mxu0 0.0
    %794 = vmatprep.subr.mxu0 0.0
    %795 = vmatpush2.msra.mxu0 0.0
    %796 = vmatprep.subr.mxu0 0.0
    %797 = vmatpush2.msra.mxu0 0.0
    %798 = vmatprep.subr.mxu0 0.0
    %799 = vmatpush2.msra.mxu0 0.0
    %800 = vmatprep.subr.mxu0 0.0
    %801 = vmatpush2.msra.mxu0 0.0
    %802 = vmatprep.subr.mxu0 0.0
    %803 = vmatpush2.msra.mxu0 0.0
    %804 = vmatprep.mubr.f32.mxu0 0.0
    %v805 = vand.u32 %v507, 4294901760
    %v806 = vsub.f32 %v507, %v805
    %v807 = vand.u32 %v806, 4294901760
    %808 = vmatmul.mubr.f32.gmra.mxu0 %v807
    %v809 = vpop.f32.mrf.mxu0
    %v810 = vadd.f32 %v736, %v809
    %v811 = vpop.f32.mrf.mxu0
    %812 = vdwg.mxu0
    %813 = vmatprep.subr.mxu0 0.0
    %814 = vmatpush1.msra.mxu0 0.0
    %815 = vmatprep.subr.mxu0 0.0
    %816 = vmatpush1.msra.mxu0 0.0
    %817 = vmatprep.subr.mxu0 0.0
    %818 = vmatpush1.msra.mxu0 0.0
    %819 = vmatprep.subr.mxu0 0.0
    %820 = vmatpush1.msra.mxu0 0.0
    %821 = vmatprep.subr.mxu0 0.0
    %822 = vmatpush1.msra.mxu0 0.0
    %823 = vmatprep.subr.mxu0 0.0
    %824 = vmatpush1.msra.mxu0 0.0
    %825 = vmatprep.subr.mxu0 0.0
    %826 = vmatpush1.msra.mxu0 0.0
    %827 = vmatprep.subr.mxu0 0.0
    %828 = vmatpush1.msra.mxu0 0.0
    %829 = vmatprep.subr.mxu0 0.0
    %830 = vmatpush1.msra.mxu0 0.0
    %831 = vmatprep.subr.mxu0 0.0
    %832 = vmatpush1.msra.mxu0 0.0
    %833 = vmatprep.subr.mxu0 0.0
    %834 = vmatpush1.msra.mxu0 0.0
    %835 = vmatprep.subr.mxu0 0.0
    %836 = vmatpush1.msra.mxu0 0.0
    %837 = vmatprep.subr.mxu0 0.0
    %838 = vmatpush1.msra.mxu0 0.0
    %839 = vmatprep.subr.mxu0 0.0
    %840 = vmatpush1.msra.mxu0 0.0
    %841 = vmatprep.subr.mxu0 0.0
    %842 = vmatpush1.msra.mxu0 0.0
    %843 = vmatprep.subr.mxu0 0.0
    %v844 = vand.u32 %v511, 4294901760
    %v845 = vsub.f32 %v511, %v844
    %v846 = vand.u32 %v845, 4294901760
    %847 = vmatpush1.msra.mxu0 %v846
    %848 = vmatprep.subr.mxu0 0.0
    %849 = vmatpush2.msra.mxu0 0.0
    %850 = vmatprep.subr.mxu0 0.0
    %851 = vmatpush2.msra.mxu0 0.0
    %852 = vmatprep.subr.mxu0 0.0
    %853 = vmatpush2.msra.mxu0 0.0
    %854 = vmatprep.subr.mxu0 0.0
    %855 = vmatpush2.msra.mxu0 0.0
    %856 = vmatprep.subr.mxu0 0.0
    %857 = vmatpush2.msra.mxu0 0.0
    %858 = vmatprep.subr.mxu0 0.0
    %859 = vmatpush2.msra.mxu0 0.0
    %860 = vmatprep.subr.mxu0 0.0
    %861 = vmatpush2.msra.mxu0 0.0
    %862 = vmatprep.subr.mxu0 0.0
    %863 = vmatpush2.msra.mxu0 0.0
    %864 = vmatprep.subr.mxu0 0.0
    %865 = vmatpush2.msra.mxu0 0.0
    %866 = vmatprep.subr.mxu0 0.0
    %867 = vmatpush2.msra.mxu0 0.0
    %868 = vmatprep.subr.mxu0 0.0
    %869 = vmatpush2.msra.mxu0 0.0
    %870 = vmatprep.subr.mxu0 0.0
    %871 = vmatpush2.msra.mxu0 0.0
    %872 = vmatprep.subr.mxu0 0.0
    %873 = vmatpush2.msra.mxu0 0.0
    %874 = vmatprep.subr.mxu0 0.0
    %875 = vmatpush2.msra.mxu0 0.0
    %876 = vmatprep.subr.mxu0 0.0
    %877 = vmatpush2.msra.mxu0 0.0
    %878 = vmatprep.subr.mxu0 0.0
    %879 = vmatpush2.msra.mxu0 0.0
    %880 = vmatprep.mubr.f32.mxu0 0.0
    %v881 = vand.u32 %v507, 4294901760
    %882 = vmatmul.mubr.f32.gmra.mxu0 %v881
    %v883 = vpop.f32.mrf.mxu0
    %v884 = vadd.f32 %v810, %v883
    %v885 = vpop.f32.mrf.mxu0
    %886 = vdwg.mxu0
    %887 = vmatprep.subr.mxu0 0.0
    %888 = vmatpush1.msra.mxu0 0.0
    %889 = vmatprep.subr.mxu0 0.0
    %890 = vmatpush1.msra.mxu0 0.0
    %891 = vmatprep.subr.mxu0 0.0
    %892 = vmatpush1.msra.mxu0 0.0
    %893 = vmatprep.subr.mxu0 0.0
    %894 = vmatpush1.msra.mxu0 0.0
    %895 = vmatprep.subr.mxu0 0.0
    %896 = vmatpush1.msra.mxu0 0.0
    %897 = vmatprep.subr.mxu0 0.0
    %898 = vmatpush1.msra.mxu0 0.0
    %899 = vmatprep.subr.mxu0 0.0
    %900 = vmatpush1.msra.mxu0 0.0
    %901 = vmatprep.subr.mxu0 0.0
    %902 = vmatpush1.msra.mxu0 0.0
    %903 = vmatprep.subr.mxu0 0.0
    %904 = vmatpush1.msra.mxu0 0.0
    %905 = vmatprep.subr.mxu0 0.0
    %906 = vmatpush1.msra.mxu0 0.0
    %907 = vmatprep.subr.mxu0 0.0
    %908 = vmatpush1.msra.mxu0 0.0
    %909 = vmatprep.subr.mxu0 0.0
    %910 = vmatpush1.msra.mxu0 0.0
    %911 = vmatprep.subr.mxu0 0.0
    %912 = vmatpush1.msra.mxu0 0.0
    %913 = vmatprep.subr.mxu0 0.0
    %914 = vmatpush1.msra.mxu0 0.0
    %915 = vmatprep.subr.mxu0 0.0
    %916 = vmatpush1.msra.mxu0 0.0
    %917 = vmatprep.subr.mxu0 0.0
    %v918 = vand.u32 %v511, 4294901760
    %919 = vmatpush1.msra.mxu0 %v918
    %920 = vmatprep.subr.mxu0 0.0
    %921 = vmatpush2.msra.mxu0 0.0
    %922 = vmatprep.subr.mxu0 0.0
    %923 = vmatpush2.msra.mxu0 0.0
    %924 = vmatprep.subr.mxu0 0.0
    %925 = vmatpush2.msra.mxu0 0.0
    %926 = vmatprep.subr.mxu0 0.0
    %927 = vmatpush2.msra.mxu0 0.0
    %928 = vmatprep.subr.mxu0 0.0
    %929 = vmatpush2.msra.mxu0 0.0
    %930 = vmatprep.subr.mxu0 0.0
    %931 = vmatpush2.msra.mxu0 0.0
    %932 = vmatprep.subr.mxu0 0.0
    %933 = vmatpush2.msra.mxu0 0.0
    %934 = vmatprep.subr.mxu0 0.0
    %935 = vmatpush2.msra.mxu0 0.0
    %936 = vmatprep.subr.mxu0 0.0
    %937 = vmatpush2.msra.mxu0 0.0
    %938 = vmatprep.subr.mxu0 0.0
    %939 = vmatpush2.msra.mxu0 0.0
    %940 = vmatprep.subr.mxu0 0.0
    %941 = vmatpush2.msra.mxu0 0.0
    %942 = vmatprep.subr.mxu0 0.0
    %943 = vmatpush2.msra.mxu0 0.0
    %944 = vmatprep.subr.mxu0 0.0
    %945 = vmatpush2.msra.mxu0 0.0
    %946 = vmatprep.subr.mxu0 0.0
    %947 = vmatpush2.msra.mxu0 0.0
    %948 = vmatprep.subr.mxu0 0.0
    %949 = vmatpush2.msra.mxu0 0.0
    %950 = vmatprep.subr.mxu0 0.0
    %951 = vmatpush2.msra.mxu0 0.0
    %952 = vmatprep.mubr.f32.mxu0 0.0
    %v953 = vand.u32 %v507, 4294901760
    %954 = vmatmul.mubr.f32.gmra.mxu0 %v953
    %v955 = vpop.f32.mrf.mxu0
    %v956 = vadd.f32 %v884, %v955
    %v957 = vpop.f32.mrf.mxu0
    %958 = vdwg.mxu0
    %959 = vst.msk [vmem:[#allocation5] sm:$0xff] %vm42, %v956
    %s960 = scalar_lea.vmem %s0, 4
    %v961 = vld [vmem:[%s960] sm:$0xf]
    %s962 = scalar_lea.vmem [#allocation2], 16
    %v963 = vld [vmem:[%s962] sm:$0xff]
    %v964 = vld [vmem:[%s962 + $0x8] sm:$0xff]
    %v966 = vsel %vm42, %v961, 0
    %968 = vmatprep.subr.mxu0 0.0
    %969 = vmatpush1.msra.mxu0 0.0
    %970 = vmatprep.subr.mxu0 0.0
    %971 = vmatpush1.msra.mxu0 0.0
    %972 = vmatprep.subr.mxu0 0.0
    %973 = vmatpush1.msra.mxu0 0.0
    %974 = vmatprep.subr.mxu0 0.0
    %975 = vmatpush1.msra.mxu0 0.0
    %976 = vmatprep.subr.mxu0 0.0
    %977 = vmatpush1.msra.mxu0 0.0
    %978 = vmatprep.subr.mxu0 0.0
    %979 = vmatpush1.msra.mxu0 0.0
    %980 = vmatprep.subr.mxu0 0.0
    %981 = vmatpush1.msra.mxu0 0.0
    %982 = vmatprep.subr.mxu0 0.0
    %983 = vmatpush1.msra.mxu0 0.0
    %984 = vmatprep.subr.mxu0 0.0
    %985 = vmatpush1.msra.mxu0 0.0
    %986 = vmatprep.subr.mxu0 0.0
    %987 = vmatpush1.msra.mxu0 0.0
    %988 = vmatprep.subr.mxu0 0.0
    %989 = vmatpush1.msra.mxu0 0.0
    %990 = vmatprep.subr.mxu0 0.0
    %991 = vmatpush1.msra.mxu0 0.0
    %992 = vmatprep.subr.mxu0 0.0
    %993 = vmatpush1.msra.mxu0 0.0
    %994 = vmatprep.subr.mxu0 0.0
    %995 = vmatpush1.msra.mxu0 0.0
    %996 = vmatprep.subr.mxu0 0.0
    %v997 = vand.u32 %v964, 4294901760
    %998 = vmatpush1.msra.mxu0 %v997
    %999 = vmatprep.subr.mxu0 0.0
    %v1000 = vand.u32 %v963, 4294901760
    %1001 = vmatpush1.msra.mxu0 %v1000
    %1002 = vmatprep.subr.mxu0 0.0
    %1003 = vmatpush2.msra.mxu0 0.0
    %1004 = vmatprep.subr.mxu0 0.0
    %1005 = vmatpush2.msra.mxu0 0.0
    %1006 = vmatprep.subr.mxu0 0.0
    %1007 = vmatpush2.msra.mxu0 0.0
    %1008 = vmatprep.subr.mxu0 0.0
    %1009 = vmatpush2.msra.mxu0 0.0
    %1010 = vmatprep.subr.mxu0 0.0
    %1011 = vmatpush2.msra.mxu0 0.0
    %1012 = vmatprep.subr.mxu0 0.0
    %1013 = vmatpush2.msra.mxu0 0.0
    %1014 = vmatprep.subr.mxu0 0.0
    %1015 = vmatpush2.msra.mxu0 0.0
    %1016 = vmatprep.subr.mxu0 0.0
    %1017 = vmatpush2.msra.mxu0 0.0
    %1018 = vmatprep.subr.mxu0 0.0
    %1019 = vmatpush2.msra.mxu0 0.0
    %1020 = vmatprep.subr.mxu0 0.0
    %1021 = vmatpush2.msra.mxu0 0.0
    %1022 = vmatprep.subr.mxu0 0.0
    %1023 = vmatpush2.msra.mxu0 0.0
    %1024 = vmatprep.subr.mxu0 0.0
    %1025 = vmatpush2.msra.mxu0 0.0
    %1026 = vmatprep.subr.mxu0 0.0
    %1027 = vmatpush2.msra.mxu0 0.0
    %1028 = vmatprep.subr.mxu0 0.0
    %1029 = vmatpush2.msra.mxu0 0.0
    %1030 = vmatprep.subr.mxu0 0.0
    %1031 = vmatpush2.msra.mxu0 0.0
    %1032 = vmatprep.subr.mxu0 0.0
    %1033 = vmatpush2.msra.mxu0 0.0
    %1034 = vmatprep.mubr.f32.mxu0 0.0
    %v1035 = vand.u32 %v966, 4294901760
    %v1036 = vsub.f32 %v966, %v1035
    %v1037 = vand.u32 %v1036, 4294901760
    %v1038 = vsub.f32 %v1036, %v1037
    %v1039 = vand.u32 %v1038, 4294901760
    %1040 = vmatmul.mubr.f32.gmra.mxu0 %v1039
    %v1041 = vpop.f32.mrf.mxu0
    %v1042 = vadd.f32 0.0, %v1041
    %v1043 = vpop.f32.mrf.mxu0
    %1044 = vdwg.mxu0
    %1045 = vmatprep.subr.mxu0 0.0
    %1046 = vmatpush1.msra.mxu0 0.0
    %1047 = vmatprep.subr.mxu0 0.0
    %1048 = vmatpush1.msra.mxu0 0.0
    %1049 = vmatprep.subr.mxu0 0.0
    %1050 = vmatpush1.msra.mxu0 0.0
    %1051 = vmatprep.subr.mxu0 0.0
    %1052 = vmatpush1.msra.mxu0 0.0
    %1053 = vmatprep.subr.mxu0 0.0
    %1054 = vmatpush1.msra.mxu0 0.0
    %1055 = vmatprep.subr.mxu0 0.0
    %1056 = vmatpush1.msra.mxu0 0.0
    %1057 = vmatprep.subr.mxu0 0.0
    %1058 = vmatpush1.msra.mxu0 0.0
    %1059 = vmatprep.subr.mxu0 0.0
    %1060 = vmatpush1.msra.mxu0 0.0
    %1061 = vmatprep.subr.mxu0 0.0
    %1062 = vmatpush1.msra.mxu0 0.0
    %1063 = vmatprep.subr.mxu0 0.0
    %1064 = vmatpush1.msra.mxu0 0.0
    %1065 = vmatprep.subr.mxu0 0.0
    %1066 = vmatpush1.msra.mxu0 0.0
    %1067 = vmatprep.subr.mxu0 0.0
    %1068 = vmatpush1.msra.mxu0 0.0
    %1069 = vmatprep.subr.mxu0 0.0
    %1070 = vmatpush1.msra.mxu0 0.0
    %1071 = vmatprep.subr.mxu0 0.0
    %1072 = vmatpush1.msra.mxu0 0.0
    %1073 = vmatprep.subr.mxu0 0.0
    %v1074 = vand.u32 %v964, 4294901760
    %v1075 = vsub.f32 %v964, %v1074
    %v1076 = vand.u32 %v1075, 4294901760
    %v1077 = vsub.f32 %v1075, %v1076
    %v1078 = vand.u32 %v1077, 4294901760
    %1079 = vmatpush1.msra.mxu0 %v1078
    %1080 = vmatprep.subr.mxu0 0.0
    %v1081 = vand.u32 %v963, 4294901760
    %v1082 = vsub.f32 %v963, %v1081
    %v1083 = vand.u32 %v1082, 4294901760
    %v1084 = vsub.f32 %v1082, %v1083
    %v1085 = vand.u32 %v1084, 4294901760
    %1086 = vmatpush1.msra.mxu0 %v1085
    %1087 = vmatprep.subr.mxu0 0.0
    %1088 = vmatpush2.msra.mxu0 0.0
    %1089 = vmatprep.subr.mxu0 0.0
    %1090 = vmatpush2.msra.mxu0 0.0
    %1091 = vmatprep.subr.mxu0 0.0
    %1092 = vmatpush2.msra.mxu0 0.0
    %1093 = vmatprep.subr.mxu0 0.0
    %1094 = vmatpush2.msra.mxu0 0.0
    %1095 = vmatprep.subr.mxu0 0.0
    %1096 = vmatpush2.msra.mxu0 0.0
    %1097 = vmatprep.subr.mxu0 0.0
    %1098 = vmatpush2.msra.mxu0 0.0
    %1099 = vmatprep.subr.mxu0 0.0
    %1100 = vmatpush2.msra.mxu0 0.0
    %1101 = vmatprep.subr.mxu0 0.0
    %1102 = vmatpush2.msra.mxu0 0.0
    %1103 = vmatprep.subr.mxu0 0.0
    %1104 = vmatpush2.msra.mxu0 0.0
    %1105 = vmatprep.subr.mxu0 0.0
    %1106 = vmatpush2.msra.mxu0 0.0
    %1107 = vmatprep.subr.mxu0 0.0
    %1108 = vmatpush2.msra.mxu0 0.0
    %1109 = vmatprep.subr.mxu0 0.0
    %1110 = vmatpush2.msra.mxu0 0.0
    %1111 = vmatprep.subr.mxu0 0.0
    %1112 = vmatpush2.msra.mxu0 0.0
    %1113 = vmatprep.subr.mxu0 0.0
    %1114 = vmatpush2.msra.mxu0 0.0
    %1115 = vmatprep.subr.mxu0 0.0
    %1116 = vmatpush2.msra.mxu0 0.0
    %1117 = vmatprep.subr.mxu0 0.0
    %1118 = vmatpush2.msra.mxu0 0.0
    %1119 = vmatprep.mubr.f32.mxu0 0.0
    %v1120 = vand.u32 %v966, 4294901760
    %1121 = vmatmul.mubr.f32.gmra.mxu0 %v1120
    %v1122 = vpop.f32.mrf.mxu0
    %v1123 = vadd.f32 %v1042, %v1122
    %v1124 = vpop.f32.mrf.mxu0
    %1125 = vdwg.mxu0
    %1126 = vmatprep.subr.mxu0 0.0
    %1127 = vmatpush1.msra.mxu0 0.0
    %1128 = vmatprep.subr.mxu0 0.0
    %1129 = vmatpush1.msra.mxu0 0.0
    %1130 = vmatprep.subr.mxu0 0.0
    %1131 = vmatpush1.msra.mxu0 0.0
    %1132 = vmatprep.subr.mxu0 0.0
    %1133 = vmatpush1.msra.mxu0 0.0
    %1134 = vmatprep.subr.mxu0 0.0
    %1135 = vmatpush1.msra.mxu0 0.0
    %1136 = vmatprep.subr.mxu0 0.0
    %1137 = vmatpush1.msra.mxu0 0.0
    %1138 = vmatprep.subr.mxu0 0.0
    %1139 = vmatpush1.msra.mxu0 0.0
    %1140 = vmatprep.subr.mxu0 0.0
    %1141 = vmatpush1.msra.mxu0 0.0
    %1142 = vmatprep.subr.mxu0 0.0
    %1143 = vmatpush1.msra.mxu0 0.0
    %1144 = vmatprep.subr.mxu0 0.0
    %1145 = vmatpush1.msra.mxu0 0.0
    %1146 = vmatprep.subr.mxu0 0.0
    %1147 = vmatpush1.msra.mxu0 0.0
    %1148 = vmatprep.subr.mxu0 0.0
    %1149 = vmatpush1.msra.mxu0 0.0
    %1150 = vmatprep.subr.mxu0 0.0
    %1151 = vmatpush1.msra.mxu0 0.0
    %1152 = vmatprep.subr.mxu0 0.0
    %1153 = vmatpush1.msra.mxu0 0.0
    %1154 = vmatprep.subr.mxu0 0.0
    %v1155 = vand.u32 %v964, 4294901760
    %v1156 = vsub.f32 %v964, %v1155
    %1157 = vmatpush1.msra.mxu0 %v1156
    %1158 = vmatprep.subr.mxu0 0.0
    %v1159 = vand.u32 %v963, 4294901760
    %v1160 = vsub.f32 %v963, %v1159
    %1161 = vmatpush1.msra.mxu0 %v1160
    %1162 = vmatprep.subr.mxu0 0.0
    %1163 = vmatpush2.msra.mxu0 0.0
    %1164 = vmatprep.subr.mxu0 0.0
    %1165 = vmatpush2.msra.mxu0 0.0
    %1166 = vmatprep.subr.mxu0 0.0
    %1167 = vmatpush2.msra.mxu0 0.0
    %1168 = vmatprep.subr.mxu0 0.0
    %1169 = vmatpush2.msra.mxu0 0.0
    %1170 = vmatprep.subr.mxu0 0.0
    %1171 = vmatpush2.msra.mxu0 0.0
    %1172 = vmatprep.subr.mxu0 0.0
    %1173 = vmatpush2.msra.mxu0 0.0
    %1174 = vmatprep.subr.mxu0 0.0
    %1175 = vmatpush2.msra.mxu0 0.0
    %1176 = vmatprep.subr.mxu0 0.0
    %1177 = vmatpush2.msra.mxu0 0.0
    %1178 = vmatprep.subr.mxu0 0.0
    %1179 = vmatpush2.msra.mxu0 0.0
    %1180 = vmatprep.subr.mxu0 0.0
    %1181 = vmatpush2.msra.mxu0 0.0
    %1182 = vmatprep.subr.mxu0 0.0
    %1183 = vmatpush2.msra.mxu0 0.0
    %1184 = vmatprep.subr.mxu0 0.0
    %1185 = vmatpush2.msra.mxu0 0.0
    %1186 = vmatprep.subr.mxu0 0.0
    %1187 = vmatpush2.msra.mxu0 0.0
    %1188 = vmatprep.subr.mxu0 0.0
    %1189 = vmatpush2.msra.mxu0 0.0
    %1190 = vmatprep.subr.mxu0 0.0
    %1191 = vmatpush2.msra.mxu0 0.0
    %1192 = vmatprep.subr.mxu0 0.0
    %1193 = vmatpush2.msra.mxu0 0.0
    %1194 = vmatprep.mubr.f32.mxu0 0.0
    %v1195 = vand.u32 %v966, 4294901760
    %v1196 = vsub.f32 %v966, %v1195
    %1197 = vmatmul.mubr.f32.gmra.mxu0 %v1196
    %v1198 = vpop.f32.mrf.mxu0
    %v1199 = vadd.f32 %v1123, %v1198
    %v1200 = vpop.f32.mrf.mxu0
    %1201 = vdwg.mxu0
    %1202 = vmatprep.subr.mxu0 0.0
    %1203 = vmatpush1.msra.mxu0 0.0
    %1204 = vmatprep.subr.mxu0 0.0
    %1205 = vmatpush1.msra.mxu0 0.0
    %1206 = vmatprep.subr.mxu0 0.0
    %1207 = vmatpush1.msra.mxu0 0.0
    %1208 = vmatprep.subr.mxu0 0.0
    %1209 = vmatpush1.msra.mxu0 0.0
    %1210 = vmatprep.subr.mxu0 0.0
    %1211 = vmatpush1.msra.mxu0 0.0
    %1212 = vmatprep.subr.mxu0 0.0
    %1213 = vmatpush1.msra.mxu0 0.0
    %1214 = vmatprep.subr.mxu0 0.0
    %1215 = vmatpush1.msra.mxu0 0.0
    %1216 = vmatprep.subr.mxu0 0.0
    %1217 = vmatpush1.msra.mxu0 0.0
    %1218 = vmatprep.subr.mxu0 0.0
    %1219 = vmatpush1.msra.mxu0 0.0
    %1220 = vmatprep.subr.mxu0 0.0
    %1221 = vmatpush1.msra.mxu0 0.0
    %1222 = vmatprep.subr.mxu0 0.0
    %1223 = vmatpush1.msra.mxu0 0.0
    %1224 = vmatprep.subr.mxu0 0.0
    %1225 = vmatpush1.msra.mxu0 0.0
    %1226 = vmatprep.subr.mxu0 0.0
    %1227 = vmatpush1.msra.mxu0 0.0
    %1228 = vmatprep.subr.mxu0 0.0
    %1229 = vmatpush1.msra.mxu0 0.0
    %1230 = vmatprep.subr.mxu0 0.0
    %v1231 = vand.u32 %v964, 4294901760
    %1232 = vmatpush1.msra.mxu0 %v1231
    %1233 = vmatprep.subr.mxu0 0.0
    %v1234 = vand.u32 %v963, 4294901760
    %1235 = vmatpush1.msra.mxu0 %v1234
    %1236 = vmatprep.subr.mxu0 0.0
    %1237 = vmatpush2.msra.mxu0 0.0
    %1238 = vmatprep.subr.mxu0 0.0
    %1239 = vmatpush2.msra.mxu0 0.0
    %1240 = vmatprep.subr.mxu0 0.0
    %1241 = vmatpush2.msra.mxu0 0.0
    %1242 = vmatprep.subr.mxu0 0.0
    %1243 = vmatpush2.msra.mxu0 0.0
    %1244 = vmatprep.subr.mxu0 0.0
    %1245 = vmatpush2.msra.mxu0 0.0
    %1246 = vmatprep.subr.mxu0 0.0
    %1247 = vmatpush2.msra.mxu0 0.0
    %1248 = vmatprep.subr.mxu0 0.0
    %1249 = vmatpush2.msra.mxu0 0.0
    %1250 = vmatprep.subr.mxu0 0.0
    %1251 = vmatpush2.msra.mxu0 0.0
    %1252 = vmatprep.subr.mxu0 0.0
    %1253 = vmatpush2.msra.mxu0 0.0
    %1254 = vmatprep.subr.mxu0 0.0
    %1255 = vmatpush2.msra.mxu0 0.0
    %1256 = vmatprep.subr.mxu0 0.0
    %1257 = vmatpush2.msra.mxu0 0.0
    %1258 = vmatprep.subr.mxu0 0.0
    %1259 = vmatpush2.msra.mxu0 0.0
    %1260 = vmatprep.subr.mxu0 0.0
    %1261 = vmatpush2.msra.mxu0 0.0
    %1262 = vmatprep.subr.mxu0 0.0
    %1263 = vmatpush2.msra.mxu0 0.0
    %1264 = vmatprep.subr.mxu0 0.0
    %1265 = vmatpush2.msra.mxu0 0.0
    %1266 = vmatprep.subr.mxu0 0.0
    %1267 = vmatpush2.msra.mxu0 0.0
    %1268 = vmatprep.mubr.f32.mxu0 0.0
    %v1269 = vand.u32 %v966, 4294901760
    %v1270 = vsub.f32 %v966, %v1269
    %v1271 = vand.u32 %v1270, 4294901760
    %1272 = vmatmul.mubr.f32.gmra.mxu0 %v1271
    %v1273 = vpop.f32.mrf.mxu0
    %v1274 = vadd.f32 %v1199, %v1273
    %v1275 = vpop.f32.mrf.mxu0
    %1276 = vdwg.mxu0
    %1277 = vmatprep.subr.mxu0 0.0
    %1278 = vmatpush1.msra.mxu0 0.0
    %1279 = vmatprep.subr.mxu0 0.0
    %1280 = vmatpush1.msra.mxu0 0.0
    %1281 = vmatprep.subr.mxu0 0.0
    %1282 = vmatpush1.msra.mxu0 0.0
    %1283 = vmatprep.subr.mxu0 0.0
    %1284 = vmatpush1.msra.mxu0 0.0
    %1285 = vmatprep.subr.mxu0 0.0
    %1286 = vmatpush1.msra.mxu0 0.0
    %1287 = vmatprep.subr.mxu0 0.0
    %1288 = vmatpush1.msra.mxu0 0.0
    %1289 = vmatprep.subr.mxu0 0.0
    %1290 = vmatpush1.msra.mxu0 0.0
    %1291 = vmatprep.subr.mxu0 0.0
    %1292 = vmatpush1.msra.mxu0 0.0
    %1293 = vmatprep.subr.mxu0 0.0
    %1294 = vmatpush1.msra.mxu0 0.0
    %1295 = vmatprep.subr.mxu0 0.0
    %1296 = vmatpush1.msra.mxu0 0.0
    %1297 = vmatprep.subr.mxu0 0.0
    %1298 = vmatpush1.msra.mxu0 0.0
    %1299 = vmatprep.subr.mxu0 0.0
    %1300 = vmatpush1.msra.mxu0 0.0
    %1301 = vmatprep.subr.mxu0 0.0
    %1302 = vmatpush1.msra.mxu0 0.0
    %1303 = vmatprep.subr.mxu0 0.0
    %1304 = vmatpush1.msra.mxu0 0.0
    %1305 = vmatprep.subr.mxu0 0.0
    %v1306 = vand.u32 %v964, 4294901760
    %v1307 = vsub.f32 %v964, %v1306
    %v1308 = vand.u32 %v1307, 4294901760
    %1309 = vmatpush1.msra.mxu0 %v1308
    %1310 = vmatprep.subr.mxu0 0.0
    %v1311 = vand.u32 %v963, 4294901760
    %v1312 = vsub.f32 %v963, %v1311
    %v1313 = vand.u32 %v1312, 4294901760
    %1314 = vmatpush1.msra.mxu0 %v1313
    %1315 = vmatprep.subr.mxu0 0.0
    %1316 = vmatpush2.msra.mxu0 0.0
    %1317 = vmatprep.subr.mxu0 0.0
    %1318 = vmatpush2.msra.mxu0 0.0
    %1319 = vmatprep.subr.mxu0 0.0
    %1320 = vmatpush2.msra.mxu0 0.0
    %1321 = vmatprep.subr.mxu0 0.0
    %1322 = vmatpush2.msra.mxu0 0.0
    %1323 = vmatprep.subr.mxu0 0.0
    %1324 = vmatpush2.msra.mxu0 0.0
    %1325 = vmatprep.subr.mxu0 0.0
    %1326 = vmatpush2.msra.mxu0 0.0
    %1327 = vmatprep.subr.mxu0 0.0
    %1328 = vmatpush2.msra.mxu0 0.0
    %1329 = vmatprep.subr.mxu0 0.0
    %1330 = vmatpush2.msra.mxu0 0.0
    %1331 = vmatprep.subr.mxu0 0.0
    %1332 = vmatpush2.msra.mxu0 0.0
    %1333 = vmatprep.subr.mxu0 0.0
    %1334 = vmatpush2.msra.mxu0 0.0
    %1335 = vmatprep.subr.mxu0 0.0
    %1336 = vmatpush2.msra.mxu0 0.0
    %1337 = vmatprep.subr.mxu0 0.0
    %1338 = vmatpush2.msra.mxu0 0.0
    %1339 = vmatprep.subr.mxu0 0.0
    %1340 = vmatpush2.msra.mxu0 0.0
    %1341 = vmatprep.subr.mxu0 0.0
    %1342 = vmatpush2.msra.mxu0 0.0
    %1343 = vmatprep.subr.mxu0 0.0
    %1344 = vmatpush2.msra.mxu0 0.0
    %1345 = vmatprep.subr.mxu0 0.0
    %1346 = vmatpush2.msra.mxu0 0.0
    %1347 = vmatprep.mubr.f32.mxu0 0.0
    %v1348 = vand.u32 %v966, 4294901760
    %1349 = vmatmul.mubr.f32.gmra.mxu0 %v1348
    %v1350 = vpop.f32.mrf.mxu0
    %v1351 = vadd.f32 %v1274, %v1350
    %v1352 = vpop.f32.mrf.mxu0
    %1353 = vdwg.mxu0
    %1354 = vmatprep.subr.mxu0 0.0
    %1355 = vmatpush1.msra.mxu0 0.0
    %1356 = vmatprep.subr.mxu0 0.0
    %1357 = vmatpush1.msra.mxu0 0.0
    %1358 = vmatprep.subr.mxu0 0.0
    %1359 = vmatpush1.msra.mxu0 0.0
    %1360 = vmatprep.subr.mxu0 0.0
    %1361 = vmatpush1.msra.mxu0 0.0
    %1362 = vmatprep.subr.mxu0 0.0
    %1363 = vmatpush1.msra.mxu0 0.0
    %1364 = vmatprep.subr.mxu0 0.0
    %1365 = vmatpush1.msra.mxu0 0.0
    %1366 = vmatprep.subr.mxu0 0.0
    %1367 = vmatpush1.msra.mxu0 0.0
    %1368 = vmatprep.subr.mxu0 0.0
    %1369 = vmatpush1.msra.mxu0 0.0
    %1370 = vmatprep.subr.mxu0 0.0
    %1371 = vmatpush1.msra.mxu0 0.0
    %1372 = vmatprep.subr.mxu0 0.0
    %1373 = vmatpush1.msra.mxu0 0.0
    %1374 = vmatprep.subr.mxu0 0.0
    %1375 = vmatpush1.msra.mxu0 0.0
    %1376 = vmatprep.subr.mxu0 0.0
    %1377 = vmatpush1.msra.mxu0 0.0
    %1378 = vmatprep.subr.mxu0 0.0
    %1379 = vmatpush1.msra.mxu0 0.0
    %1380 = vmatprep.subr.mxu0 0.0
    %1381 = vmatpush1.msra.mxu0 0.0
    %1382 = vmatprep.subr.mxu0 0.0
    %v1383 = vand.u32 %v964, 4294901760
    %1384 = vmatpush1.msra.mxu0 %v1383
    %1385 = vmatprep.subr.mxu0 0.0
    %v1386 = vand.u32 %v963, 4294901760
    %1387 = vmatpush1.msra.mxu0 %v1386
    %1388 = vmatprep.subr.mxu0 0.0
    %1389 = vmatpush2.msra.mxu0 0.0
    %1390 = vmatprep.subr.mxu0 0.0
    %1391 = vmatpush2.msra.mxu0 0.0
    %1392 = vmatprep.subr.mxu0 0.0
    %1393 = vmatpush2.msra.mxu0 0.0
    %1394 = vmatprep.subr.mxu0 0.0
    %1395 = vmatpush2.msra.mxu0 0.0
    %1396 = vmatprep.subr.mxu0 0.0
    %1397 = vmatpush2.msra.mxu0 0.0
    %1398 = vmatprep.subr.mxu0 0.0
    %1399 = vmatpush2.msra.mxu0 0.0
    %1400 = vmatprep.subr.mxu0 0.0
    %1401 = vmatpush2.msra.mxu0 0.0
    %1402 = vmatprep.subr.mxu0 0.0
    %1403 = vmatpush2.msra.mxu0 0.0
    %1404 = vmatprep.subr.mxu0 0.0
    %1405 = vmatpush2.msra.mxu0 0.0
    %1406 = vmatprep.subr.mxu0 0.0
    %1407 = vmatpush2.msra.mxu0 0.0
    %1408 = vmatprep.subr.mxu0 0.0
    %1409 = vmatpush2.msra.mxu0 0.0
    %1410 = vmatprep.subr.mxu0 0.0
    %1411 = vmatpush2.msra.mxu0 0.0
    %1412 = vmatprep.subr.mxu0 0.0
    %1413 = vmatpush2.msra.mxu0 0.0
    %1414 = vmatprep.subr.mxu0 0.0
    %1415 = vmatpush2.msra.mxu0 0.0
    %1416 = vmatprep.subr.mxu0 0.0
    %1417 = vmatpush2.msra.mxu0 0.0
    %1418 = vmatprep.subr.mxu0 0.0
    %1419 = vmatpush2.msra.mxu0 0.0
    %1420 = vmatprep.mubr.f32.mxu0 0.0
    %v1421 = vand.u32 %v966, 4294901760
    %1422 = vmatmul.mubr.f32.gmra.mxu0 %v1421
    %v1423 = vpop.f32.mrf.mxu0
    %v1424 = vadd.f32 %v1351, %v1423
    %v1425 = vpop.f32.mrf.mxu0
    %1426 = vdwg.mxu0
    %v1428 = vsel %vm509, %v1424, 0
    %1430 = vmatprep.subr.mxu0 0.0
    %1431 = vmatpush1.msra.mxu0 0.0
    %1432 = vmatprep.subr.mxu0 0.0
    %1433 = vmatpush1.msra.mxu0 0.0
    %1434 = vmatprep.subr.mxu0 0.0
    %1435 = vmatpush1.msra.mxu0 0.0
    %1436 = vmatprep.subr.mxu0 0.0
    %1437 = vmatpush1.msra.mxu0 0.0
    %1438 = vmatprep.subr.mxu0 0.0
    %1439 = vmatpush1.msra.mxu0 0.0
    %1440 = vmatprep.subr.mxu0 0.0
    %1441 = vmatpush1.msra.mxu0 0.0
    %1442 = vmatprep.subr.mxu0 0.0
    %1443 = vmatpush1.msra.mxu0 0.0
    %1444 = vmatprep.subr.mxu0 0.0
    %1445 = vmatpush1.msra.mxu0 0.0
    %1446 = vmatprep.subr.mxu0 0.0
    %1447 = vmatpush1.msra.mxu0 0.0
    %1448 = vmatprep.subr.mxu0 0.0
    %1449 = vmatpush1.msra.mxu0 0.0
    %1450 = vmatprep.subr.mxu0 0.0
    %1451 = vmatpush1.msra.mxu0 0.0
    %1452 = vmatprep.subr.mxu0 0.0
    %1453 = vmatpush1.msra.mxu0 0.0
    %1454 = vmatprep.subr.mxu0 0.0
    %1455 = vmatpush1.msra.mxu0 0.0
    %1456 = vmatprep.subr.mxu0 0.0
    %1457 = vmatpush1.msra.mxu0 0.0
    %1458 = vmatprep.subr.mxu0 0.0
    %1459 = vmatpush1.msra.mxu0 0.0
    %1460 = vmatprep.subr.mxu0 0.0
    %v1461 = vand.u32 %v1428, 4294901760
    %1462 = vmatpush1.msra.mxu0 %v1461
    %1463 = vmatprep.subr.mxu0 0.0
    %1464 = vmatpush2.msra.mxu0 0.0
    %1465 = vmatprep.subr.mxu0 0.0
    %1466 = vmatpush2.msra.mxu0 0.0
    %1467 = vmatprep.subr.mxu0 0.0
    %1468 = vmatpush2.msra.mxu0 0.0
    %1469 = vmatprep.subr.mxu0 0.0
    %1470 = vmatpush2.msra.mxu0 0.0
    %1471 = vmatprep.subr.mxu0 0.0
    %1472 = vmatpush2.msra.mxu0 0.0
    %1473 = vmatprep.subr.mxu0 0.0
    %1474 = vmatpush2.msra.mxu0 0.0
    %1475 = vmatprep.subr.mxu0 0.0
    %1476 = vmatpush2.msra.mxu0 0.0
    %1477 = vmatprep.subr.mxu0 0.0
    %1478 = vmatpush2.msra.mxu0 0.0
    %1479 = vmatprep.subr.mxu0 0.0
    %1480 = vmatpush2.msra.mxu0 0.0
    %1481 = vmatprep.subr.mxu0 0.0
    %1482 = vmatpush2.msra.mxu0 0.0
    %1483 = vmatprep.subr.mxu0 0.0
    %1484 = vmatpush2.msra.mxu0 0.0
    %1485 = vmatprep.subr.mxu0 0.0
    %1486 = vmatpush2.msra.mxu0 0.0
    %1487 = vmatprep.subr.mxu0 0.0
    %1488 = vmatpush2.msra.mxu0 0.0
    %1489 = vmatprep.subr.mxu0 0.0
    %1490 = vmatpush2.msra.mxu0 0.0
    %1491 = vmatprep.subr.mxu0 0.0
    %1492 = vmatpush2.msra.mxu0 0.0
    %1493 = vmatprep.subr.mxu0 0.0
    %1494 = vmatpush2.msra.mxu0 0.0
    %1495 = vmatprep.mubr.f32.mxu0 0.0
    %v1496 = vand.u32 %v507, 4294901760
    %v1497 = vsub.f32 %v507, %v1496
    %v1498 = vand.u32 %v1497, 4294901760
    %v1499 = vsub.f32 %v1497, %v1498
    %v1500 = vand.u32 %v1499, 4294901760
    %1501 = vmatmul.mubr.f32.gmra.mxu0 %v1500
    %v1502 = vpop.f32.mrf.mxu0
    %v1503 = vadd.f32 %v37, %v1502
    %v1504 = vpop.f32.mrf.mxu0
    %1505 = vdwg.mxu0
    %1506 = vmatprep.subr.mxu0 0.0
    %1507 = vmatpush1.msra.mxu0 0.0
    %1508 = vmatprep.subr.mxu0 0.0
    %1509 = vmatpush1.msra.mxu0 0.0
    %1510 = vmatprep.subr.mxu0 0.0
    %1511 = vmatpush1.msra.mxu0 0.0
    %1512 = vmatprep.subr.mxu0 0.0
    %1513 = vmatpush1.msra.mxu0 0.0
    %1514 = vmatprep.subr.mxu0 0.0
    %1515 = vmatpush1.msra.mxu0 0.0
    %1516 = vmatprep.subr.mxu0 0.0
    %1517 = vmatpush1.msra.mxu0 0.0
    %1518 = vmatprep.subr.mxu0 0.0
    %1519 = vmatpush1.msra.mxu0 0.0
    %1520 = vmatprep.subr.mxu0 0.0
    %1521 = vmatpush1.msra.mxu0 0.0
    %1522 = vmatprep.subr.mxu0 0.0
    %1523 = vmatpush1.msra.mxu0 0.0
    %1524 = vmatprep.subr.mxu0 0.0
    %1525 = vmatpush1.msra.mxu0 0.0
    %1526 = vmatprep.subr.mxu0 0.0
    %1527 = vmatpush1.msra.mxu0 0.0
    %1528 = vmatprep.subr.mxu0 0.0
    %1529 = vmatpush1.msra.mxu0 0.0
    %1530 = vmatprep.subr.mxu0 0.0
    %1531 = vmatpush1.msra.mxu0 0.0
    %1532 = vmatprep.subr.mxu0 0.0
    %1533 = vmatpush1.msra.mxu0 0.0
    %1534 = vmatprep.subr.mxu0 0.0
    %1535 = vmatpush1.msra.mxu0 0.0
    %1536 = vmatprep.subr.mxu0 0.0
    %v1537 = vand.u32 %v1428, 4294901760
    %v1538 = vsub.f32 %v1428, %v1537
    %v1539 = vand.u32 %v1538, 4294901760
    %v1540 = vsub.f32 %v1538, %v1539
    %v1541 = vand.u32 %v1540, 4294901760
    %1542 = vmatpush1.msra.mxu0 %v1541
    %1543 = vmatprep.subr.mxu0 0.0
    %1544 = vmatpush2.msra.mxu0 0.0
    %1545 = vmatprep.subr.mxu0 0.0
    %1546 = vmatpush2.msra.mxu0 0.0
    %1547 = vmatprep.subr.mxu0 0.0
    %1548 = vmatpush2.msra.mxu0 0.0
    %1549 = vmatprep.subr.mxu0 0.0
    %1550 = vmatpush2.msra.mxu0 0.0
    %1551 = vmatprep.subr.mxu0 0.0
    %1552 = vmatpush2.msra.mxu0 0.0
    %1553 = vmatprep.subr.mxu0 0.0
    %1554 = vmatpush2.msra.mxu0 0.0
    %1555 = vmatprep.subr.mxu0 0.0
    %1556 = vmatpush2.msra.mxu0 0.0
    %1557 = vmatprep.subr.mxu0 0.0
    %1558 = vmatpush2.msra.mxu0 0.0
    %1559 = vmatprep.subr.mxu0 0.0
    %1560 = vmatpush2.msra.mxu0 0.0
    %1561 = vmatprep.subr.mxu0 0.0
    %1562 = vmatpush2.msra.mxu0 0.0
    %1563 = vmatprep.subr.mxu0 0.0
    %1564 = vmatpush2.msra.mxu0 0.0
    %1565 = vmatprep.subr.mxu0 0.0
    %1566 = vmatpush2.msra.mxu0 0.0
    %1567 = vmatprep.subr.mxu0 0.0
    %1568 = vmatpush2.msra.mxu0 0.0
    %1569 = vmatprep.subr.mxu0 0.0
    %1570 = vmatpush2.msra.mxu0 0.0
    %1571 = vmatprep.subr.mxu0 0.0
    %1572 = vmatpush2.msra.mxu0 0.0
    %1573 = vmatprep.subr.mxu0 0.0
    %1574 = vmatpush2.msra.mxu0 0.0
    %1575 = vmatprep.mubr.f32.mxu0 0.0
    %v1576 = vand.u32 %v507, 4294901760
    %1577 = vmatmul.mubr.f32.gmra.mxu0 %v1576
    %v1578 = vpop.f32.mrf.mxu0
    %v1579 = vadd.f32 %v1503, %v1578
    %v1580 = vpop.f32.mrf.mxu0
    %1581 = vdwg.mxu0
    %1582 = vmatprep.subr.mxu0 0.0
    %1583 = vmatpush1.msra.mxu0 0.0
    %1584 = vmatprep.subr.mxu0 0.0
    %1585 = vmatpush1.msra.mxu0 0.0
    %1586 = vmatprep.subr.mxu0 0.0
    %1587 = vmatpush1.msra.mxu0 0.0
    %1588 = vmatprep.subr.mxu0 0.0
    %1589 = vmatpush1.msra.mxu0 0.0
    %1590 = vmatprep.subr.mxu0 0.0
    %1591 = vmatpush1.msra.mxu0 0.0
    %1592 = vmatprep.subr.mxu0 0.0
    %1593 = vmatpush1.msra.mxu0 0.0
    %1594 = vmatprep.subr.mxu0 0.0
    %1595 = vmatpush1.msra.mxu0 0.0
    %1596 = vmatprep.subr.mxu0 0.0
    %1597 = vmatpush1.msra.mxu0 0.0
    %1598 = vmatprep.subr.mxu0 0.0
    %1599 = vmatpush1.msra.mxu0 0.0
    %1600 = vmatprep.subr.mxu0 0.0
    %1601 = vmatpush1.msra.mxu0 0.0
    %1602 = vmatprep.subr.mxu0 0.0
    %1603 = vmatpush1.msra.mxu0 0.0
    %1604 = vmatprep.subr.mxu0 0.0
    %1605 = vmatpush1.msra.mxu0 0.0
    %1606 = vmatprep.subr.mxu0 0.0
    %1607 = vmatpush1.msra.mxu0 0.0
    %1608 = vmatprep.subr.mxu0 0.0
    %1609 = vmatpush1.msra.mxu0 0.0
    %1610 = vmatprep.subr.mxu0 0.0
    %1611 = vmatpush1.msra.mxu0 0.0
    %1612 = vmatprep.subr.mxu0 0.0
    %v1613 = vand.u32 %v1428, 4294901760
    %v1614 = vsub.f32 %v1428, %v1613
    %1615 = vmatpush1.msra.mxu0 %v1614
    %1616 = vmatprep.subr.mxu0 0.0
    %1617 = vmatpush2.msra.mxu0 0.0
    %1618 = vmatprep.subr.mxu0 0.0
    %1619 = vmatpush2.msra.mxu0 0.0
    %1620 = vmatprep.subr.mxu0 0.0
    %1621 = vmatpush2.msra.mxu0 0.0
    %1622 = vmatprep.subr.mxu0 0.0
    %1623 = vmatpush2.msra.mxu0 0.0
    %1624 = vmatprep.subr.mxu0 0.0
    %1625 = vmatpush2.msra.mxu0 0.0
    %1626 = vmatprep.subr.mxu0 0.0
    %1627 = vmatpush2.msra.mxu0 0.0
    %1628 = vmatprep.subr.mxu0 0.0
    %1629 = vmatpush2.msra.mxu0 0.0
    %1630 = vmatprep.subr.mxu0 0.0
    %1631 = vmatpush2.msra.mxu0 0.0
    %1632 = vmatprep.subr.mxu0 0.0
    %1633 = vmatpush2.msra.mxu0 0.0
    %1634 = vmatprep.subr.mxu0 0.0
    %1635 = vmatpush2.msra.mxu0 0.0
    %1636 = vmatprep.subr.mxu0 0.0
    %1637 = vmatpush2.msra.mxu0 0.0
    %1638 = vmatprep.subr.mxu0 0.0
    %1639 = vmatpush2.msra.mxu0 0.0
    %1640 = vmatprep.subr.mxu0 0.0
    %1641 = vmatpush2.msra.mxu0 0.0
    %1642 = vmatprep.subr.mxu0 0.0
    %1643 = vmatpush2.msra.mxu0 0.0
    %1644 = vmatprep.subr.mxu0 0.0
    %1645 = vmatpush2.msra.mxu0 0.0
    %1646 = vmatprep.subr.mxu0 0.0
    %1647 = vmatpush2.msra.mxu0 0.0
    %1648 = vmatprep.mubr.f32.mxu0 0.0
    %v1649 = vand.u32 %v507, 4294901760
    %v1650 = vsub.f32 %v507, %v1649
    %1651 = vmatmul.mubr.f32.gmra.mxu0 %v1650
    %v1652 = vpop.f32.mrf.mxu0
    %v1653 = vadd.f32 %v1579, %v1652
    %v1654 = vpop.f32.mrf.mxu0
    %1655 = vdwg.mxu0
    %1656 = vmatprep.subr.mxu0 0.0
    %1657 = vmatpush1.msra.mxu0 0.0
    %1658 = vmatprep.subr.mxu0 0.0
    %1659 = vmatpush1.msra.mxu0 0.0
    %1660 = vmatprep.subr.mxu0 0.0
    %1661 = vmatpush1.msra.mxu0 0.0
    %1662 = vmatprep.subr.mxu0 0.0
    %1663 = vmatpush1.msra.mxu0 0.0
    %1664 = vmatprep.subr.mxu0 0.0
    %1665 = vmatpush1.msra.mxu0 0.0
    %1666 = vmatprep.subr.mxu0 0.0
    %1667 = vmatpush1.msra.mxu0 0.0
    %1668 = vmatprep.subr.mxu0 0.0
    %1669 = vmatpush1.msra.mxu0 0.0
    %1670 = vmatprep.subr.mxu0 0.0
    %1671 = vmatpush1.msra.mxu0 0.0
    %1672 = vmatprep.subr.mxu0 0.0
    %1673 = vmatpush1.msra.mxu0 0.0
    %1674 = vmatprep.subr.mxu0 0.0
    %1675 = vmatpush1.msra.mxu0 0.0
    %1676 = vmatprep.subr.mxu0 0.0
    %1677 = vmatpush1.msra.mxu0 0.0
    %1678 = vmatprep.subr.mxu0 0.0
    %1679 = vmatpush1.msra.mxu0 0.0
    %1680 = vmatprep.subr.mxu0 0.0
    %1681 = vmatpush1.msra.mxu0 0.0
    %1682 = vmatprep.subr.mxu0 0.0
    %1683 = vmatpush1.msra.mxu0 0.0
    %1684 = vmatprep.subr.mxu0 0.0
    %1685 = vmatpush1.msra.mxu0 0.0
    %1686 = vmatprep.subr.mxu0 0.0
    %v1687 = vand.u32 %v1428, 4294901760
    %1688 = vmatpush1.msra.mxu0 %v1687
    %1689 = vmatprep.subr.mxu0 0.0
    %1690 = vmatpush2.msra.mxu0 0.0
    %1691 = vmatprep.subr.mxu0 0.0
    %1692 = vmatpush2.msra.mxu0 0.0
    %1693 = vmatprep.subr.mxu0 0.0
    %1694 = vmatpush2.msra.mxu0 0.0
    %1695 = vmatprep.subr.mxu0 0.0
    %1696 = vmatpush2.msra.mxu0 0.0
    %1697 = vmatprep.subr.mxu0 0.0
    %1698 = vmatpush2.msra.mxu0 0.0
    %1699 = vmatprep.subr.mxu0 0.0
    %1700 = vmatpush2.msra.mxu0 0.0
    %1701 = vmatprep.subr.mxu0 0.0
    %1702 = vmatpush2.msra.mxu0 0.0
    %1703 = vmatprep.subr.mxu0 0.0
    %1704 = vmatpush2.msra.mxu0 0.0
    %1705 = vmatprep.subr.mxu0 0.0
    %1706 = vmatpush2.msra.mxu0 0.0
    %1707 = vmatprep.subr.mxu0 0.0
    %1708 = vmatpush2.msra.mxu0 0.0
    %1709 = vmatprep.subr.mxu0 0.0
    %1710 = vmatpush2.msra.mxu0 0.0
    %1711 = vmatprep.subr.mxu0 0.0
    %1712 = vmatpush2.msra.mxu0 0.0
    %1713 = vmatprep.subr.mxu0 0.0
    %1714 = vmatpush2.msra.mxu0 0.0
    %1715 = vmatprep.subr.mxu0 0.0
    %1716 = vmatpush2.msra.mxu0 0.0
    %1717 = vmatprep.subr.mxu0 0.0
    %1718 = vmatpush2.msra.mxu0 0.0
    %1719 = vmatprep.subr.mxu0 0.0
    %1720 = vmatpush2.msra.mxu0 0.0
    %1721 = vmatprep.mubr.f32.mxu0 0.0
    %v1722 = vand.u32 %v507, 4294901760
    %v1723 = vsub.f32 %v507, %v1722
    %v1724 = vand.u32 %v1723, 4294901760
    %1725 = vmatmul.mubr.f32.gmra.mxu0 %v1724
    %v1726 = vpop.f32.mrf.mxu0
    %v1727 = vadd.f32 %v1653, %v1726
    %v1728 = vpop.f32.mrf.mxu0
    %1729 = vdwg.mxu0
    %1730 = vmatprep.subr.mxu0 0.0
    %1731 = vmatpush1.msra.mxu0 0.0
    %1732 = vmatprep.subr.mxu0 0.0
    %1733 = vmatpush1.msra.mxu0 0.0
    %1734 = vmatprep.subr.mxu0 0.0
    %1735 = vmatpush1.msra.mxu0 0.0
    %1736 = vmatprep.subr.mxu0 0.0
    %1737 = vmatpush1.msra.mxu0 0.0
    %1738 = vmatprep.subr.mxu0 0.0
    %1739 = vmatpush1.msra.mxu0 0.0
    %1740 = vmatprep.subr.mxu0 0.0
    %1741 = vmatpush1.msra.mxu0 0.0
    %1742 = vmatprep.subr.mxu0 0.0
    %1743 = vmatpush1.msra.mxu0 0.0
    %1744 = vmatprep.subr.mxu0 0.0
    %1745 = vmatpush1.msra.mxu0 0.0
    %1746 = vmatprep.subr.mxu0 0.0
    %1747 = vmatpush1.msra.mxu0 0.0
    %1748 = vmatprep.subr.mxu0 0.0
    %1749 = vmatpush1.msra.mxu0 0.0
    %1750 = vmatprep.subr.mxu0 0.0
    %1751 = vmatpush1.msra.mxu0 0.0
    %1752 = vmatprep.subr.mxu0 0.0
    %1753 = vmatpush1.msra.mxu0 0.0
    %1754 = vmatprep.subr.mxu0 0.0
    %1755 = vmatpush1.msra.mxu0 0.0
    %1756 = vmatprep.subr.mxu0 0.0
    %1757 = vmatpush1.msra.mxu0 0.0
    %1758 = vmatprep.subr.mxu0 0.0
    %1759 = vmatpush1.msra.mxu0 0.0
    %1760 = vmatprep.subr.mxu0 0.0
    %v1761 = vand.u32 %v1428, 4294901760
    %v1762 = vsub.f32 %v1428, %v1761
    %v1763 = vand.u32 %v1762, 4294901760
    %1764 = vmatpush1.msra.mxu0 %v1763
    %1765 = vmatprep.subr.mxu0 0.0
    %1766 = vmatpush2.msra.mxu0 0.0
    %1767 = vmatprep.subr.mxu0 0.0
    %1768 = vmatpush2.msra.mxu0 0.0
    %1769 = vmatprep.subr.mxu0 0.0
    %1770 = vmatpush2.msra.mxu0 0.0
    %1771 = vmatprep.subr.mxu0 0.0
    %1772 = vmatpush2.msra.mxu0 0.0
    %1773 = vmatprep.subr.mxu0 0.0
    %1774 = vmatpush2.msra.mxu0 0.0
    %1775 = vmatprep.subr.mxu0 0.0
    %1776 = vmatpush2.msra.mxu0 0.0
    %1777 = vmatprep.subr.mxu0 0.0
    %1778 = vmatpush2.msra.mxu0 0.0
    %1779 = vmatprep.subr.mxu0 0.0
    %1780 = vmatpush2.msra.mxu0 0.0
    %1781 = vmatprep.subr.mxu0 0.0
    %1782 = vmatpush2.msra.mxu0 0.0
    %1783 = vmatprep.subr.mxu0 0.0
    %1784 = vmatpush2.msra.mxu0 0.0
    %1785 = vmatprep.subr.mxu0 0.0
    %1786 = vmatpush2.msra.mxu0 0.0
    %1787 = vmatprep.subr.mxu0 0.0
    %1788 = vmatpush2.msra.mxu0 0.0
    %1789 = vmatprep.subr.mxu0 0.0
    %1790 = vmatpush2.msra.mxu0 0.0
    %1791 = vmatprep.subr.mxu0 0.0
    %1792 = vmatpush2.msra.mxu0 0.0
    %1793 = vmatprep.subr.mxu0 0.0
    %1794 = vmatpush2.msra.mxu0 0.0
    %1795 = vmatprep.subr.mxu0 0.0
    %1796 = vmatpush2.msra.mxu0 0.0
    %1797 = vmatprep.mubr.f32.mxu0 0.0
    %v1798 = vand.u32 %v507, 4294901760
    %1799 = vmatmul.mubr.f32.gmra.mxu0 %v1798
    %v1800 = vpop.f32.mrf.mxu0
    %v1801 = vadd.f32 %v1727, %v1800
    %v1802 = vpop.f32.mrf.mxu0
    %1803 = vdwg.mxu0
    %1804 = vmatprep.subr.mxu0 0.0
    %1805 = vmatpush1.msra.mxu0 0.0
    %1806 = vmatprep.subr.mxu0 0.0
    %1807 = vmatpush1.msra.mxu0 0.0
    %1808 = vmatprep.subr.mxu0 0.0
    %1809 = vmatpush1.msra.mxu0 0.0
    %1810 = vmatprep.subr.mxu0 0.0
    %1811 = vmatpush1.msra.mxu0 0.0
    %1812 = vmatprep.subr.mxu0 0.0
    %1813 = vmatpush1.msra.mxu0 0.0
    %1814 = vmatprep.subr.mxu0 0.0
    %1815 = vmatpush1.msra.mxu0 0.0
    %1816 = vmatprep.subr.mxu0 0.0
    %1817 = vmatpush1.msra.mxu0 0.0
    %1818 = vmatprep.subr.mxu0 0.0
    %1819 = vmatpush1.msra.mxu0 0.0
    %1820 = vmatprep.subr.mxu0 0.0
    %1821 = vmatpush1.msra.mxu0 0.0
    %1822 = vmatprep.subr.mxu0 0.0
    %1823 = vmatpush1.msra.mxu0 0.0
    %1824 = vmatprep.subr.mxu0 0.0
    %1825 = vmatpush1.msra.mxu0 0.0
    %1826 = vmatprep.subr.mxu0 0.0
    %1827 = vmatpush1.msra.mxu0 0.0
    %1828 = vmatprep.subr.mxu0 0.0
    %1829 = vmatpush1.msra.mxu0 0.0
    %1830 = vmatprep.subr.mxu0 0.0
    %1831 = vmatpush1.msra.mxu0 0.0
    %1832 = vmatprep.subr.mxu0 0.0
    %1833 = vmatpush1.msra.mxu0 0.0
    %1834 = vmatprep.subr.mxu0 0.0
    %v1835 = vand.u32 %v1428, 4294901760
    %1836 = vmatpush1.msra.mxu0 %v1835
    %1837 = vmatprep.subr.mxu0 0.0
    %1838 = vmatpush2.msra.mxu0 0.0
    %1839 = vmatprep.subr.mxu0 0.0
    %1840 = vmatpush2.msra.mxu0 0.0
    %1841 = vmatprep.subr.mxu0 0.0
    %1842 = vmatpush2.msra.mxu0 0.0
    %1843 = vmatprep.subr.mxu0 0.0
    %1844 = vmatpush2.msra.mxu0 0.0
    %1845 = vmatprep.subr.mxu0 0.0
    %1846 = vmatpush2.msra.mxu0 0.0
    %1847 = vmatprep.subr.mxu0 0.0
    %1848 = vmatpush2.msra.mxu0 0.0
    %1849 = vmatprep.subr.mxu0 0.0
    %1850 = vmatpush2.msra.mxu0 0.0
    %1851 = vmatprep.subr.mxu0 0.0
    %1852 = vmatpush2.msra.mxu0 0.0
    %1853 = vmatprep.subr.mxu0 0.0
    %1854 = vmatpush2.msra.mxu0 0.0
    %1855 = vmatprep.subr.mxu0 0.0
    %1856 = vmatpush2.msra.mxu0 0.0
    %1857 = vmatprep.subr.mxu0 0.0
    %1858 = vmatpush2.msra.mxu0 0.0
    %1859 = vmatprep.subr.mxu0 0.0
    %1860 = vmatpush2.msra.mxu0 0.0
    %1861 = vmatprep.subr.mxu0 0.0
    %1862 = vmatpush2.msra.mxu0 0.0
    %1863 = vmatprep.subr.mxu0 0.0
    %1864 = vmatpush2.msra.mxu0 0.0
    %1865 = vmatprep.subr.mxu0 0.0
    %1866 = vmatpush2.msra.mxu0 0.0
    %1867 = vmatprep.subr.mxu0 0.0
    %1868 = vmatpush2.msra.mxu0 0.0
    %1869 = vmatprep.mubr.f32.mxu0 0.0
    %v1870 = vand.u32 %v507, 4294901760
    %1871 = vmatmul.mubr.f32.gmra.mxu0 %v1870
    %v1872 = vpop.f32.mrf.mxu0
    %v1873 = vadd.f32 %v1801, %v1872
    %v1874 = vpop.f32.mrf.mxu0
    %1875 = vdwg.mxu0
    %s1876 = scalar_lea.vmem [#allocation5], 8
    %1877 = vst.msk [vmem:[%s1876] sm:$0xff] %vm42, %v1873
    // Predicated region
    $region22: #{tpu_custom_call.1} parent=1 // pred_check
      _
    $region23: #{tpu_custom_call.1} parent=1 // pred_check_branch
      %1879 = sbr.rel (0) target = $region25
    $region24: #{tpu_custom_call.1} parent=1 // pred_region
      %s1881 = ssub.s32 256, 256
      %1882 = vsyncadd [#allocation4], %s1881
      %s1883 = sshll.u32 [#allocation5], 4
      %s1884 = int_to_ptr.vmem [resolvable:$true] %s1883
      %1889 = dma.vmem_to_hbm [thread:$0]  %s1884, 256, %s4, [#allocation4], 128, 128, 8
    $region25: #{tpu_custom_call.1} parent=1 // pred_fallthru
      _
    // Predicated region
    $region26: #{tpu_custom_call.1} parent=1 // pred_check
      _
    $region27: #{tpu_custom_call.1} parent=1 // pred_check_branch
      %1891 = sbr.rel (0) target = $region29
    $region28: #{tpu_custom_call.1} parent=1 // pred_region
      %1892 = dma.done [#allocation4], 256
    $region29: #{tpu_custom_call.1} parent=1 // pred_fallthru
      _
    %1893 = vsyncpa [#allocation3], 1
    %1894 = vsyncpa [#allocation4], 1

</llo_original>
